<compile_context>
chip_gen: v5e
topology: v5e:2x2
jax: 0.10.0
libtpu: 0.0.40
codegen_flags: <defaults>
</compile_context>

<pallas_src>
import functools
import math

import jax
import jax.numpy as jnp
from jax import lax
from jax.experimental import pallas as pl
from jax.experimental.pallas import tpu as pltpu


# ----------------------------------------------------------------------------
# Kernels
# ----------------------------------------------------------------------------
def _epilogue(h, h_ref, sum_ref, sq_ref, out_w):
    # F.normalize(dim=-1, p=2): x / max(||x||, 1e-12) == x * rsqrt(max(||x||^2, 1e-24))
    sq = jnp.sum(h * h, axis=-1, keepdims=True)            # (TN, 1)
    inv_norm = lax.rsqrt(jnp.maximum(sq, 1e-24))            # EUP rsqrt, no divide
    h = jnp.maximum(h * inv_norm, 0.0)                      # normalize + ReLU (fp32)

    # Per-(batch, row-tile) BatchNorm partial statistics in fp32. No carried
    # accumulator across grid steps -> both grid axes can be "parallel".
    sum_ref[0, 0] = jnp.sum(h, axis=0, keepdims=True)
    sq_ref[0, 0] = jnp.sum(h * h, axis=0, keepdims=True)

    # Store h: bf16 padded width when BN follows, fp32 Fout when final output.
    h_ref[0] = h[:, :out_w].astype(h_ref.dtype)


def _sage_agg_first_kernel(adj_ref, x_ref, wt_ref, b_ref,
                           h_ref, sum_ref, sq_ref, *, out_w):
    # Fin <= Fp: (adj @ x) @ W^T. adj/x arrive fp32; cast to bf16 in-kernel so
    # no standalone HBM cast pass exists in the wrapper.
    adj = adj_ref[0].astype(jnp.bfloat16)                    # (TN, N)
    xv = x_ref[0].astype(jnp.bfloat16)                       # (N, Fin)
    agg = jnp.dot(adj, xv, preferred_element_type=jnp.float32)
    h = jnp.dot(agg.astype(jnp.bfloat16), wt_ref[...],
                preferred_element_type=jnp.float32) + b_ref[...]
    _epilogue(h, h_ref, sum_ref, sq_ref, out_w)


def _sage_preproj_kernel(adj_ref, xw_ref, b_ref,
                         h_ref, sum_ref, sq_ref, *, out_w):
    # Fp < Fin: x @ W^T hoisted to the wrapper; aggregate in the narrow width.
    adj = adj_ref[0].astype(jnp.bfloat16)                    # (TN, N)
    h = jnp.dot(adj, xw_ref[0],
                preferred_element_type=jnp.float32) + b_ref[...]
    _epilogue(h, h_ref, sum_ref, sq_ref, out_w)


def _bn_kernel(h_ref, scale_ref, shift_ref, o_ref, *, fout):
    # BatchNorm as one FMA, with the Fp -> Fout channel slice folded in, so the
    # padded intermediate is read exactly once and never rewritten.
    hv = h_ref[0][:, :fout].astype(jnp.float32)
    o_ref[0] = hv * scale_ref[...] + shift_ref[...]


# ----------------------------------------------------------------------------
# Helpers
# ----------------------------------------------------------------------------
def _round_up(v, m):
    return ((v + m - 1) // m) * m


def _choose_row_tile(N, row_tile):
    if row_tile is not None:
        assert N % row_tile == 0, "row_tile must divide N"
        assert row_tile == N or row_tile % 8 == 0, \
            "row_tile must be N or a multiple of 8"
        return row_tile
    if N <= 512:
        return N
    # v6e/v7x MXUs are 256 wide: prefer 256 rows per pass, avoid tiny tiles.
    for cand in (256, 512, 384, 128, 768, 64, 32, 16, 8):
        if N % cand == 0:
            return cand
    return N   # TODO(synk): pad + mask rows instead of a full-N tile.


def _vmem_budget_bytes():
    cap = None
    if hasattr(pltpu, "get_tpu_info"):
        try:
            cap = int(getattr(pltpu.get_tpu_info(), "vmem_capacity_bytes", 0)) or None
        except Exception:
            cap = None
    if cap is None:
        cap = 64 << 20          # conservative: v7x physical VMEM per TensorCore
    return (cap * 3) // 4        # leave headroom for compiler-internal scratch


def _main_vmem_estimate(N, TN, Fin, Fp, pre_project, out_w, out_bytes,
                        single_buffer):
    res = 1 if single_buffer else 2
    est = 2 * TN * N * 4                       # adj fp32 row tile, double-buffered
    if pre_project:
        est += res * N * Fp * 2                # xw bf16, per-batch resident
    else:
        est += res * N * Fin * 4               # x fp32, per-batch resident
        est += res * Fin * Fp * 2              # W^T bf16, grid-constant
    est += res * Fp * 4                        # bias
    est += 2 * TN * out_w * out_bytes          # h output tile
    est += 2 * 2 * Fp * 4                      # per-tile stats
    return est


# ----------------------------------------------------------------------------
# Wrapper
# ----------------------------------------------------------------------------
def batched_graphsage_forward(x, adj, W, b, gamma=None, beta=None, *,
                              use_bn=True, row_tile=None):
    """Forward pass of BatchedGraphSAGE (training-mode BN) on TPU via Pallas."""
    B, N, Fin = x.shape
    Fout = W.shape[0]
    assert adj.shape == (B, N, N)
    if use_bn:
        assert gamma is not None and beta is not None

    Fp = _round_up(Fout, 128)                  # lane-dense projected width
    TN = _choose_row_tile(N, row_tile)
    NT = N // TN
    budget = _vmem_budget_bytes()

    # Pad the tiny parameters to the lane-dense width; padded columns are zero
    # so norms / stats / real channels are unaffected and padded outputs are 0.
    W_pad = jnp.zeros((Fp, Fin), jnp.float32).at[:Fout].set(W.astype(jnp.float32))
    wt_bf = W_pad.T.astype(jnp.bfloat16)                            # (Fin, Fp)
    bias2 = jnp.zeros((1, Fp), jnp.float32).at[0, :Fout].set(b.astype(jnp.float32))

    # Matmul-order choice: FLOPs are N^2*Fin + N*Fin*Fp vs N*Fin*Fp + N^2*Fp.
    pre_project = Fp < Fin
    out_w = Fp if use_bn else Fout
    h_dtype = jnp.bfloat16 if use_bn else jnp.float32
    out_bytes = 2 if use_bn else 4

    if pre_project:
        # Hoisted projection (plain XLA einsum, fp32 accumulate, bf16 result):
        # removes the old t==0 pipeline bubble and the (N, Fp) VMEM scratch.
        xw = jnp.einsum("bnf,fo->bno", x.astype(jnp.bfloat16), wt_bf,
                        preferred_element_type=jnp.float32).astype(jnp.bfloat16)
        kernel = functools.partial(_sage_preproj_kernel, out_w=out_w)
        operands = (adj, xw, bias2)
    else:
        kernel = functools.partial(_sage_agg_first_kernel, out_w=out_w)
        operands = (adj, x, wt_bf, bias2)

    def run_main(single_buffer):
        def resident(shape, imap):
            # Per-batch-resident / grid-constant inputs: single-buffered when
            # supported (halves their VMEM footprint; they change at most once
            # per batch).
            if single_buffer:
                return pl.BlockSpec(shape, imap, pipeline_mode=pl.Buffered(1))
            return pl.BlockSpec(shape, imap)

        adj_spec = pl.BlockSpec((1, TN, N), lambda bi, ti: (bi, ti, 0))
        bias_spec = resident((1, Fp), lambda bi, ti: (0, 0))
        if pre_project:
            in_specs = [adj_spec,
                        resident((1, N, Fp), lambda bi, ti: (bi, 0, 0)),
                        bias_spec]
        else:
            in_specs = [adj_spec,
                        resident((1, N, Fin), lambda bi, ti: (bi, 0, 0)),
                        resident((Fin, Fp), lambda bi, ti: (0, 0)),
                        bias_spec]

        est = _main_vmem_estimate(N, TN, Fin, Fp, pre_project, out_w,
                                  out_bytes, single_buffer)
        vmem_limit = min(max(int(est * 1.25) + (2 << 20), 32 << 20), budget)

        return pl.pallas_call(
            kernel,
            grid=(B, NT),
            in_specs=in_specs,
            out_specs=[
                pl.BlockSpec((1, TN, out_w), lambda bi, ti: (bi, ti, 0)),
                pl.BlockSpec((1, 1, 1, Fp), lambda bi, ti: (bi, ti, 0, 0)),
                pl.BlockSpec((1, 1, 1, Fp), lambda bi, ti: (bi, ti, 0, 0)),
            ],
            out_shape=(
                jax.ShapeDtypeStruct((B, N, out_w), h_dtype),
                jax.ShapeDtypeStruct((B, NT, 1, Fp), jnp.float32),
                jax.ShapeDtypeStruct((B, NT, 1, Fp), jnp.float32),
            ),
            compiler_params=pltpu.CompilerParams(
                dimension_semantics=("parallel", "parallel"),
                vmem_limit_bytes=vmem_limit,
            ),
        )(*operands)

    single = hasattr(pl, "Buffered")
    try:
        h, psum, psq = run_main(single)
    except Exception:
        if not single:
            raise
        h, psum, psq = run_main(False)          # fallback: default buffering

    if not use_bn:
        return h                                 # (B, N, Fout) fp32, already sliced

    # Training-mode BatchNorm1d (biased variance) from the fp32 partial sums;
    # folded into one per-channel FMA applied by the second kernel.
    count = float(B * N)
    total = jnp.sum(psum, axis=(0, 1, 2))[:Fout]
    total_sq = jnp.sum(psq, axis=(0, 1, 2))[:Fout]
    mean = total / count
    var = jnp.maximum(total_sq / count - mean * mean, 0.0)
    scale = gamma.astype(jnp.float32) * lax.rsqrt(var + 1e-5)
    shift = beta.astype(jnp.float32) - mean * scale

    bn_est = 2 * (TN * Fp * 2 + TN * Fout * 4) + 8 * Fout
    bn_limit = min(max(2 * bn_est + (2 << 20), 16 << 20), budget)

    out = pl.pallas_call(
        functools.partial(_bn_kernel, fout=Fout),
        grid=(B, NT),
        in_specs=[
            pl.BlockSpec((1, TN, Fp), lambda bi, ti: (bi, ti, 0)),
            pl.BlockSpec((1, Fout), lambda bi, ti: (0, 0)),
            pl.BlockSpec((1, Fout), lambda bi, ti: (0, 0)),
        ],
        out_specs=pl.BlockSpec((1, TN, Fout), lambda bi, ti: (bi, ti, 0)),
        out_shape=jax.ShapeDtypeStruct((B, N, Fout), jnp.float32),
        compiler_params=pltpu.CompilerParams(
            dimension_semantics=("parallel", "parallel"),
            vmem_limit_bytes=bn_limit,
        ),
    )(h, scale.reshape(1, Fout), shift.reshape(1, Fout))

    return out


# ----------------------------------------------------------------------------
# Pure-JAX reference (matmul dtype / order configurable for tight comparison)
# ----------------------------------------------------------------------------
def _ref_forward(x, adj, W, b, gamma=None, beta=None, *, use_bn=True,
                 matmul_dtype=jnp.float32, pre_project=False):
    cast = lambda a: a.astype(matmul_dtype)
    if pre_project:
        xw = jnp.einsum("bnf,of->bno", cast(x), cast(W),
                        preferred_element_type=jnp.float32)
        h = jnp.einsum("bij,bjo->bio", cast(adj), cast(xw),
                       preferred_element_type=jnp.float32) + b
    else:
        hn = jnp.einsum("bij,bjf->bif", cast(adj), cast(x),
                        preferred_element_type=jnp.float32)
        h = jnp.einsum("bif,of->bio", cast(hn), cast(W),
                       preferred_element_type=jnp.float32) + b
    norm = jnp.sqrt(jnp.sum(h * h, axis=2, keepdims=True))
    h = h / jnp.maximum(norm, 1e-12)
    h = jnp.maximum(h, 0.0)
    if not use_bn:
        return h
    mean = jnp.mean(h, axis=(0, 1))
    var = jnp.mean((h - mean) ** 2, axis=(0, 1))
    return (h - mean) / jnp.sqrt(var + 1e-5) * gamma + beta


def _make_params(key, Fin, Fout):
    kw, kb = jax.random.split(key)
    gain = math.sqrt(2.0)                                   # relu gain
    w_bound = gain * math.sqrt(6.0 / (Fin + Fout))          # xavier_uniform_
    W = jax.random.uniform(kw, (Fout, Fin), minval=-w_bound, maxval=w_bound,
                           dtype=jnp.float32)
    b_bound = 1.0 / math.sqrt(Fin)                          # default Linear bias init
    b = jax.random.uniform(kb, (Fout,), minval=-b_bound, maxval=b_bound,
                           dtype=jnp.float32)
    gamma = jnp.ones((Fout,), jnp.float32)                  # fresh BatchNorm1d
    beta = jnp.zeros((Fout,), jnp.float32)
    return W, b, gamma, beta


if __name__ == "__main__":
    key = jax.random.PRNGKey(0)

    # ---- Config 1: Fin <= Fout (aggregate-then-project path) ----------------
    B, N, Fin, Fout = 2, 16, 16, 32
    k1, k2, k3, key = jax.random.split(key, 4)
    x = jax.random.normal(k1, (B, N, Fin), dtype=jnp.float32)
    adj = jax.random.uniform(k2, (B, N, N), dtype=jnp.float32)
    W, b, gamma, beta = _make_params(k3, Fin, Fout)

    out = jax.block_until_ready(
        batched_graphsage_forward(x, adj, W, b, gamma, beta, use_bn=True))
    assert out.shape == (B, N, Fout)

    # Matched-precision reference (bf16 MXU operands, same matmul order).
    ref_bf16 = _ref_forward(x, adj, W, b, gamma, beta,
                            matmul_dtype=jnp.bfloat16, pre_project=False)
    assert jnp.allclose(out, ref_bf16, rtol=2e-2, atol=2e-2), \
        "mismatch vs matched-precision reference (config 1)"

    # Loose sanity check against the pure-fp32 module semantics.
    ref_f32 = _ref_forward(x, adj, W, b, gamma, beta)
    assert jnp.allclose(out, ref_f32, rtol=2.5e-1, atol=1.5e-1), \
        "mismatch vs fp32 reference (config 1)"

    # use_bn=False branch (fp32 output straight from the first kernel).
    out_nobn = jax.block_until_ready(
        batched_graphsage_forward(x, adj, W, b, gamma, beta, use_bn=False))
    ref_nobn = _ref_forward(x, adj, W, b, use_bn=False,
                            matmul_dtype=jnp.bfloat16, pre_project=False)
    assert jnp.allclose(out_nobn, ref_nobn, rtol=1e-2, atol=1e-2), \
        "mismatch vs reference (use_bn=False)"

    # ---- Config 2: Fout < Fin (hoisted pre-projection path) -----------------
    B2, N2, Fin2, Fout2 = 2, 16, 256, 16
    k1, k2, k3, key = jax.random.split(key, 4)
    x2 = jax.random.normal(k1, (B2, N2, Fin2), dtype=jnp.float32)
    adj2 = jax.random.uniform(k2, (B2, N2, N2), dtype=jnp.float32)
    W2, b2_, gamma2, beta2 = _make_params(k3, Fin2, Fout2)

    out2 = jax.block_until_ready(
        batched_graphsage_forward(x2, adj2, W2, b2_, gamma2, beta2, use_bn=True))
    assert out2.shape == (B2, N2, Fout2)

    ref2 = _ref_forward(x2, adj2, W2, b2_, gamma2, beta2,
                        matmul_dtype=jnp.bfloat16, pre_project=True)
    assert jnp.allclose(out2, ref2, rtol=2e-2, atol=2e-2), \
        "mismatch vs matched-precision reference (config 2)"

    print("KERNEL_OK")
</pallas_src>

<mosaic_0001>
module attributes {stable_mosaic.version = 11 : i64} {
  func.func @_sage_agg_first_kernel(%arg0: i32, %arg1: i32, %arg2: memref<1x16x16xf32, #tpu.memory_space<vmem>>, %arg3: memref<1x16x16xf32, #tpu.memory_space<vmem>>, %arg4: memref<16x128xbf16, #tpu.memory_space<vmem>>, %arg5: memref<1x128xf32, #tpu.memory_space<vmem>>, %arg6: memref<1x16x128xbf16, #tpu.memory_space<vmem>>, %arg7: memref<1x1x1x128xf32, #tpu.memory_space<vmem>>, %arg8: memref<1x1x1x128xf32, #tpu.memory_space<vmem>>) attributes {dimension_semantics = [#tpu.dimension_semantics<parallel>, #tpu.dimension_semantics<parallel>], iteration_bounds = array<i64: 2, 1>, scalar_prefetch = 0 : i64, scratch_operands = 0 : i64, tpu.core_type = #tpu.core_type<tc>, window_params = [{transform_indices = @transform_0, window_bounds = array<i64: 1, 16, 16>}, {pipeline_mode = #tpu.pipeline_mode<synchronous>, transform_indices = @transform_1, window_bounds = array<i64: 1, 16, 16>}, {pipeline_mode = #tpu.pipeline_mode<synchronous>, transform_indices = @transform_2, window_bounds = array<i64: 16, 128>}, {pipeline_mode = #tpu.pipeline_mode<synchronous>, transform_indices = @transform_3, window_bounds = array<i64: 1, 128>}, {transform_indices = @transform_4, window_bounds = array<i64: 1, 16, 128>}, {transform_indices = @transform_5, window_bounds = array<i64: 1, 1, 1, 128>}, {transform_indices = @transform_6, window_bounds = array<i64: 1, 1, 1, 128>}]} {
    %c0 = arith.constant 0 : index
    %c0_0 = arith.constant 0 : index
    %c0_1 = arith.constant 0 : index
    %0 = vector.load %arg2[%c0, %c0_0, %c0_1] : memref<1x16x16xf32, #tpu.memory_space<vmem>>, vector<1x16x16xf32>
    %1 = vector.shape_cast %0 : vector<1x16x16xf32> to vector<16x16xf32>
    %2 = arith.truncf %1 : vector<16x16xf32> to vector<16x16xbf16>
    %c0_2 = arith.constant 0 : index
    %c0_3 = arith.constant 0 : index
    %c0_4 = arith.constant 0 : index
    %3 = vector.load %arg3[%c0_2, %c0_3, %c0_4] : memref<1x16x16xf32, #tpu.memory_space<vmem>>, vector<1x16x16xf32>
    %4 = vector.shape_cast %3 : vector<1x16x16xf32> to vector<16x16xf32>
    %5 = arith.truncf %4 : vector<16x16xf32> to vector<16x16xbf16>
    %cst = arith.constant dense<0.000000e+00> : vector<16x16xf32>
    %6 = tpu.matmul %2, %5, %cst {dimension_numbers = #tpu.dot_dimension_numbers<[1], [0], [0], [1], [0, 0, 1, 1], [], []>} : vector<16x16xbf16>, vector<16x16xbf16>, vector<16x16xf32> -> vector<16x16xf32>
    %7 = arith.truncf %6 : vector<16x16xf32> to vector<16x16xbf16>
    %c0_5 = arith.constant 0 : index
    %c0_6 = arith.constant 0 : index
    %8 = vector.load %arg4[%c0_5, %c0_6] : memref<16x128xbf16, #tpu.memory_space<vmem>>, vector<16x128xbf16>
    %cst_7 = arith.constant dense<0.000000e+00> : vector<16x128xf32>
    %9 = tpu.matmul %7, %8, %cst_7 {dimension_numbers = #tpu.dot_dimension_numbers<[1], [0], [0], [1], [0, 0, 1, 1], [], []>} : vector<16x16xbf16>, vector<16x128xbf16>, vector<16x128xf32> -> vector<16x128xf32>
    %c0_8 = arith.constant 0 : index
    %c0_9 = arith.constant 0 : index
    %10 = vector.load %arg5[%c0_8, %c0_9] : memref<1x128xf32, #tpu.memory_space<vmem>>, vector<1x128xf32>
    %11 = vector.broadcast %10 : vector<1x128xf32> to vector<16x128xf32>
    %12 = arith.addf %9, %11 : vector<16x128xf32>
    %13 = arith.mulf %12, %12 : vector<16x128xf32>
    %cst_10 = arith.constant dense<0.000000e+00> : vector<16xf32>
    %14 = vector.multi_reduction <add>, %13, %cst_10 [1] : vector<16x128xf32> to vector<16xf32>
    %15 = vector.shape_cast %14 : vector<16xf32> to vector<16x1xf32>
    %cst_11 = arith.constant 1.000000e-24 : f32
    %16 = vector.broadcast %cst_11 : f32 to vector<16x1xf32>
    %17 = arith.maximumf %15, %16 : vector<16x1xf32>
    %18 = math.rsqrt %17 : vector<16x1xf32>
    %19 = vector.broadcast %18 : vector<16x1xf32> to vector<16x128xf32>
    %20 = arith.mulf %12, %19 : vector<16x128xf32>
    %cst_12 = arith.constant 0.000000e+00 : f32
    %21 = vector.broadcast %cst_12 : f32 to vector<16x128xf32>
    %22 = arith.maximumf %20, %21 : vector<16x128xf32>
    %cst_13 = arith.constant dense<0.000000e+00> : vector<128xf32>
    %23 = vector.multi_reduction <add>, %22, %cst_13 [0] : vector<16x128xf32> to vector<128xf32>
    %24 = vector.shape_cast %23 : vector<128xf32> to vector<1x128xf32>
    %c0_14 = arith.constant 0 : index
    %c0_15 = arith.constant 0 : index
    %c0_16 = arith.constant 0 : index
    %c0_17 = arith.constant 0 : index
    %25 = vector.load %arg7[%c0_14, %c0_15, %c0_16, %c0_17] : memref<1x1x1x128xf32, #tpu.memory_space<vmem>>, vector<1x1x1x128xf32>
    %26 = vector.shape_cast %25 : vector<1x1x1x128xf32> to vector<1x128xf32>
    %27 = vector.shape_cast %24 : vector<1x128xf32> to vector<1x1x1x128xf32>
    tpu.vector_store %arg7[%c0_14, %c0_15, %c0_16, %c0_17], %27 {strides = array<i32>} : memref<1x1x1x128xf32, #tpu.memory_space<vmem>>, vector<1x1x1x128xf32>,
    %28 = arith.mulf %22, %22 : vector<16x128xf32>
    %cst_18 = arith.constant dense<0.000000e+00> : vector<128xf32>
    %29 = vector.multi_reduction <add>, %28, %cst_18 [0] : vector<16x128xf32> to vector<128xf32>
    %30 = vector.shape_cast %29 : vector<128xf32> to vector<1x128xf32>
    %c0_19 = arith.constant 0 : index
    %c0_20 = arith.constant 0 : index
    %c0_21 = arith.constant 0 : index
    %c0_22 = arith.constant 0 : index
    %31 = vector.load %arg8[%c0_19, %c0_20, %c0_21, %c0_22] : memref<1x1x1x128xf32, #tpu.memory_space<vmem>>, vector<1x1x1x128xf32>
    %32 = vector.shape_cast %31 : vector<1x1x1x128xf32> to vector<1x128xf32>
    %33 = vector.shape_cast %30 : vector<1x128xf32> to vector<1x1x1x128xf32>
    tpu.vector_store %arg8[%c0_19, %c0_20, %c0_21, %c0_22], %33 {strides = array<i32>} : memref<1x1x1x128xf32, #tpu.memory_space<vmem>>, vector<1x1x1x128xf32>,
    %34 = arith.truncf %22 : vector<16x128xf32> to vector<16x128xbf16>
    %c0_23 = arith.constant 0 : index
    %c0_24 = arith.constant 0 : index
    %c0_25 = arith.constant 0 : index
    %35 = vector.load %arg6[%c0_23, %c0_24, %c0_25] : memref<1x16x128xbf16, #tpu.memory_space<vmem>>, vector<1x16x128xbf16>
    %36 = vector.shape_cast %35 : vector<1x16x128xbf16> to vector<16x128xbf16>
    %37 = vector.shape_cast %34 : vector<16x128xbf16> to vector<1x16x128xbf16>
    tpu.vector_store %arg6[%c0_23, %c0_24, %c0_25], %37 {strides = array<i32>} : memref<1x16x128xbf16, #tpu.memory_space<vmem>>, vector<1x16x128xbf16>,
    return
  }
  func.func @transform_0(%arg0: i32, %arg1: i32) -> (i32, i32, i32) {
    %c0_i32 = arith.constant 0 : i32
    %c0_i32_0 = arith.constant 0 : i32
    return %arg0, %arg1, %c0_i32 : i32, i32, i32
  }
  func.func @transform_1(%arg0: i32, %arg1: i32) -> (i32, i32, i32) {
    %c0_i32 = arith.constant 0 : i32
    %c0_i32_0 = arith.constant 0 : i32
    %c0_i32_1 = arith.constant 0 : i32
    return %arg0, %c0_i32, %c0_i32_0 : i32, i32, i32
  }
  func.func @transform_2(%arg0: i32, %arg1: i32) -> (i32, i32) {
    %c0_i32 = arith.constant 0 : i32
    %c0_i32_0 = arith.constant 0 : i32
    %c0_i32_1 = arith.constant 0 : i32
    return %c0_i32, %c0_i32_0 : i32, i32
  }
  func.func @transform_3(%arg0: i32, %arg1: i32) -> (i32, i32) {
    %c0_i32 = arith.constant 0 : i32
    %c0_i32_0 = arith.constant 0 : i32
    %c0_i32_1 = arith.constant 0 : i32
    return %c0_i32, %c0_i32_0 : i32, i32
  }
  func.func @transform_4(%arg0: i32, %arg1: i32) -> (i32, i32, i32) {
    %c0_i32 = arith.constant 0 : i32
    %c0_i32_0 = arith.constant 0 : i32
    return %arg0, %arg1, %c0_i32 : i32, i32, i32
  }
  func.func @transform_5(%arg0: i32, %arg1: i32) -> (i32, i32, i32, i32) {
    %c0_i32 = arith.constant 0 : i32
    %c0_i32_0 = arith.constant 0 : i32
    %c0_i32_1 = arith.constant 0 : i32
    return %arg0, %arg1, %c0_i32, %c0_i32_0 : i32, i32, i32, i32
  }
  func.func @transform_6(%arg0: i32, %arg1: i32) -> (i32, i32, i32, i32) {
    %c0_i32 = arith.constant 0 : i32
    %c0_i32_0 = arith.constant 0 : i32
    %c0_i32_1 = arith.constant 0 : i32
    return %arg0, %arg1, %c0_i32, %c0_i32_0 : i32, i32, i32, i32
  }
}

module attributes {stable_mosaic.version = 11 : i64} {
  func.func @_sage_agg_first_kernel(%arg0: i32, %arg1: i32, %arg2: memref<1x16x16xf32, #tpu.memory_space<vmem>>, %arg3: memref<1x16x16xf32, #tpu.memory_space<vmem>>, %arg4: memref<16x128xbf16, #tpu.memory_space<vmem>>, %arg5: memref<1x128xf32, #tpu.memory_space<vmem>>, %arg6: memref<1x16x128xbf16, #tpu.memory_space<vmem>>, %arg7: memref<1x1x1x128xf32, #tpu.memory_space<vmem>>, %arg8: memref<1x1x1x128xf32, #tpu.memory_space<vmem>>) attributes {dimension_semantics = [#tpu.dimension_semantics<parallel>, #tpu.dimension_semantics<parallel>], iteration_bounds = array<i64: 2, 1>, scalar_prefetch = 0 : i64, scratch_operands = 0 : i64, tpu.core_type = #tpu.core_type<tc>, window_params = [{transform_indices = @transform_0, window_bounds = array<i64: 1, 16, 16>}, {transform_indices = @transform_1, window_bounds = array<i64: 1, 16, 16>}, {pipeline_mode = #tpu.pipeline_mode<synchronous>, transform_indices = @transform_2, window_bounds = array<i64: 16, 128>}, {pipeline_mode = #tpu.pipeline_mode<synchronous>, transform_indices = @transform_3, window_bounds = array<i64: 1, 128>}, {transform_indices = @transform_4, window_bounds = array<i64: 1, 16, 128>}, {transform_indices = @transform_5, window_bounds = array<i64: 1, 1, 1, 128>}, {transform_indices = @transform_6, window_bounds = array<i64: 1, 1, 1, 128>}]} {
    %c0 = arith.constant 0 : index
    %c0_0 = arith.constant 0 : index
    %c0_1 = arith.constant 0 : index
    %0 = vector.load %arg2[%c0, %c0_0, %c0_1] : memref<1x16x16xf32, #tpu.memory_space<vmem>>, vector<1x16x16xf32>
    %1 = vector.shape_cast %0 : vector<1x16x16xf32> to vector<16x16xf32>
    %2 = arith.truncf %1 : vector<16x16xf32> to vector<16x16xbf16>
    %c0_2 = arith.constant 0 : index
    %c0_3 = arith.constant 0 : index
    %c0_4 = arith.constant 0 : index
    %3 = vector.load %arg3[%c0_2, %c0_3, %c0_4] : memref<1x16x16xf32, #tpu.memory_space<vmem>>, vector<1x16x16xf32>
    %4 = vector.shape_cast %3 : vector<1x16x16xf32> to vector<16x16xf32>
    %5 = arith.truncf %4 : vector<16x16xf32> to vector<16x16xbf16>
    %cst = arith.constant dense<0.000000e+00> : vector<16x16xf32>
    %6 = tpu.matmul %2, %5, %cst {dimension_numbers = #tpu.dot_dimension_numbers<[1], [0], [0], [1], [0, 0, 1, 1], [], []>} : vector<16x16xbf16>, vector<16x16xbf16>, vector<16x16xf32> -> vector<16x16xf32>
    %7 = arith.truncf %6 : vector<16x16xf32> to vector<16x16xbf16>
    %c0_5 = arith.constant 0 : index
    %c0_6 = arith.constant 0 : index
    %8 = vector.load %arg4[%c0_5, %c0_6] : memref<16x128xbf16, #tpu.memory_space<vmem>>, vector<16x128xbf16>
    %cst_7 = arith.constant dense<0.000000e+00> : vector<16x128xf32>
    %9 = tpu.matmul %7, %8, %cst_7 {dimension_numbers = #tpu.dot_dimension_numbers<[1], [0], [0], [1], [0, 0, 1, 1], [], []>} : vector<16x16xbf16>, vector<16x128xbf16>, vector<16x128xf32> -> vector<16x128xf32>
    %c0_8 = arith.constant 0 : index
    %c0_9 = arith.constant 0 : index
    %10 = vector.load %arg5[%c0_8, %c0_9] : memref<1x128xf32, #tpu.memory_space<vmem>>, vector<1x128xf32>
    %11 = vector.broadcast %10 : vector<1x128xf32> to vector<16x128xf32>
    %12 = arith.addf %9, %11 : vector<16x128xf32>
    %13 = arith.mulf %12, %12 : vector<16x128xf32>
    %cst_10 = arith.constant dense<0.000000e+00> : vector<16xf32>
    %14 = vector.multi_reduction <add>, %13, %cst_10 [1] : vector<16x128xf32> to vector<16xf32>
    %15 = vector.shape_cast %14 : vector<16xf32> to vector<16x1xf32>
    %cst_11 = arith.constant 1.000000e-24 : f32
    %16 = vector.broadcast %cst_11 : f32 to vector<16x1xf32>
    %17 = arith.maximumf %15, %16 : vector<16x1xf32>
    %18 = math.rsqrt %17 : vector<16x1xf32>
    %19 = vector.broadcast %18 : vector<16x1xf32> to vector<16x128xf32>
    %20 = arith.mulf %12, %19 : vector<16x128xf32>
    %cst_12 = arith.constant 0.000000e+00 : f32
    %21 = vector.broadcast %cst_12 : f32 to vector<16x128xf32>
    %22 = arith.maximumf %20, %21 : vector<16x128xf32>
    %cst_13 = arith.constant dense<0.000000e+00> : vector<128xf32>
    %23 = vector.multi_reduction <add>, %22, %cst_13 [0] : vector<16x128xf32> to vector<128xf32>
    %24 = vector.shape_cast %23 : vector<128xf32> to vector<1x128xf32>
    %c0_14 = arith.constant 0 : index
    %c0_15 = arith.constant 0 : index
    %c0_16 = arith.constant 0 : index
    %c0_17 = arith.constant 0 : index
    %25 = vector.load %arg7[%c0_14, %c0_15, %c0_16, %c0_17] : memref<1x1x1x128xf32, #tpu.memory_space<vmem>>, vector<1x1x1x128xf32>
    %26 = vector.shape_cast %25 : vector<1x1x1x128xf32> to vector<1x128xf32>
    %27 = vector.shape_cast %24 : vector<1x128xf32> to vector<1x1x1x128xf32>
    tpu.vector_store %arg7[%c0_14, %c0_15, %c0_16, %c0_17], %27 {strides = array<i32>} : memref<1x1x1x128xf32, #tpu.memory_space<vmem>>, vector<1x1x1x128xf32>,
    %28 = arith.mulf %22, %22 : vector<16x128xf32>
    %cst_18 = arith.constant dense<0.000000e+00> : vector<128xf32>
    %29 = vector.multi_reduction <add>, %28, %cst_18 [0] : vector<16x128xf32> to vector<128xf32>
    %30 = vector.shape_cast %29 : vector<128xf32> to vector<1x128xf32>
    %c0_19 = arith.constant 0 : index
    %c0_20 = arith.constant 0 : index
    %c0_21 = arith.constant 0 : index
    %c0_22 = arith.constant 0 : index
    %31 = vector.load %arg8[%c0_19, %c0_20, %c0_21, %c0_22] : memref<1x1x1x128xf32, #tpu.memory_space<vmem>>, vector<1x1x1x128xf32>
    %32 = vector.shape_cast %31 : vector<1x1x1x128xf32> to vector<1x128xf32>
    %33 = vector.shape_cast %30 : vector<1x128xf32> to vector<1x1x1x128xf32>
    tpu.vector_store %arg8[%c0_19, %c0_20, %c0_21, %c0_22], %33 {strides = array<i32>} : memref<1x1x1x128xf32, #tpu.memory_space<vmem>>, vector<1x1x1x128xf32>,
    %34 = arith.truncf %22 : vector<16x128xf32> to vector<16x128xbf16>
    %c0_23 = arith.constant 0 : index
    %c0_24 = arith.constant 0 : index
    %c0_25 = arith.constant 0 : index
    %35 = vector.load %arg6[%c0_23, %c0_24, %c0_25] : memref<1x16x128xbf16, #tpu.memory_space<vmem>>, vector<1x16x128xbf16>
    %36 = vector.shape_cast %35 : vector<1x16x128xbf16> to vector<16x128xbf16>
    %37 = vector.shape_cast %34 : vector<16x128xbf16> to vector<1x16x128xbf16>
    tpu.vector_store %arg6[%c0_23, %c0_24, %c0_25], %37 {strides = array<i32>} : memref<1x16x128xbf16, #tpu.memory_space<vmem>>, vector<1x16x128xbf16>,
    return
  }
  func.func @transform_0(%arg0: i32, %arg1: i32) -> (i32, i32, i32) {
    %c0_i32 = arith.constant 0 : i32
    %c0_i32_0 = arith.constant 0 : i32
    return %arg0, %arg1, %c0_i32 : i32, i32, i32
  }
  func.func @transform_1(%arg0: i32, %arg1: i32) -> (i32, i32, i32) {
    %c0_i32 = arith.constant 0 : i32
    %c0_i32_0 = arith.constant 0 : i32
    %c0_i32_1 = arith.constant 0 : i32
    return %arg0, %c0_i32, %c0_i32_0 : i32, i32, i32
  }
  func.func @transform_2(%arg0: i32, %arg1: i32) -> (i32, i32) {
    %c0_i32 = arith.constant 0 : i32
    %c0_i32_0 = arith.constant 0 : i32
    %c0_i32_1 = arith.constant 0 : i32
    return %c0_i32, %c0_i32_0 : i32, i32
  }
  func.func @transform_3(%arg0: i32, %arg1: i32) -> (i32, i32) {
    %c0_i32 = arith.constant 0 : i32
    %c0_i32_0 = arith.constant 0 : i32
    %c0_i32_1 = arith.constant 0 : i32
    return %c0_i32, %c0_i32_0 : i32, i32
  }
  func.func @transform_4(%arg0: i32, %arg1: i32) -> (i32, i32, i32) {
    %c0_i32 = arith.constant 0 : i32
    %c0_i32_0 = arith.constant 0 : i32
    return %arg0, %arg1, %c0_i32 : i32, i32, i32
  }
  func.func @transform_5(%arg0: i32, %arg1: i32) -> (i32, i32, i32, i32) {
    %c0_i32 = arith.constant 0 : i32
    %c0_i32_0 = arith.constant 0 : i32
    %c0_i32_1 = arith.constant 0 : i32
    return %arg0, %arg1, %c0_i32, %c0_i32_0 : i32, i32, i32, i32
  }
  func.func @transform_6(%arg0: i32, %arg1: i32) -> (i32, i32, i32, i32) {
    %c0_i32 = arith.constant 0 : i32
    %c0_i32_0 = arith.constant 0 : i32
    %c0_i32_1 = arith.constant 0 : i32
    return %arg0, %arg1, %c0_i32, %c0_i32_0 : i32, i32, i32, i32
  }
}

</mosaic_0001>

<llo_original>
// kernel: tpu_custom_call.1
$region0: #{tpu_custom_call.1}
  #allocation0 [shape = 'u32[]', space=smem, size = 0x4, offset = 0x4, fixed_abs, tag = 'smem constant byte address 0x4 - core index']
  #allocation1 [shape = 'u32[72,128]{1,0:T(1,128)}', space=vmem, size = 0x9000, scoped, tag = 'internal scratch']
  %s0 = inlined_call_operand.hbm [shape: f32[2,16,16], index: 0, kind: input, shape index: {}]
  %s1 = inlined_call_operand.hbm [shape: f32[2,16,16], index: 1, kind: input, shape index: {}]
  %s2 = inlined_call_operand.hbm [shape: bf16[16,128], index: 2, kind: input, shape index: {}]
  %s3 = inlined_call_operand.vmem [shape: f32[1,128], index: 3, kind: input, shape index: {}]
  %s4 = inlined_call_operand.hbm [shape: bf16[2,16,128], index: 4, kind: output, shape index: {0}]
  %s5 = inlined_call_operand.hbm [shape: f32[2,1,1,128], index: 5, kind: output, shape index: {1}]
  %s6 = inlined_call_operand.hbm [shape: f32[2,1,1,128], index: 6, kind: output, shape index: {2}]
  %7 = xla_tuple %s4, %s5, %s6
  %s8 = sld [smem:[#allocation0]]
  $region77: #{tpu_custom_call.1} parent=0
    _
  %s10 = ssub.s32 1, %s8
  %s11 = scalar_select 0, %s10, %s8
  $region1: #{tpu_custom_call.1} parent=0
    #allocation2 [shape = 'u8[16384]{0}', space=vmem, size = 0x4000, scoped, tag = 'input window, operand 0']
    #allocation3 [shape = 's32[2]{0}', space=sflag, size = 0x8, scoped, tag = 'scoped memory for tpu_custom_call.1']
    #allocation4 [shape = 's32[2]{0}', space=sflag, size = 0x8, scoped, tag = 'scoped memory for tpu_custom_call.1']
    #allocation5 [shape = 'u8[8192]{0}', space=vmem, size = 0x2000, scoped, tag = 'input window, operand 1, single buffered']
    #allocation6 [shape = 's32[1]{0}', space=sflag, size = 0x4, scoped, tag = 'scoped memory for tpu_custom_call.1']
    #allocation7 [shape = 'u8[4096]{0}', space=vmem, size = 0x1000, scoped, tag = 'input window, operand 2, single buffered']
    #allocation8 [shape = 'u8[8192]{0}', space=vmem, size = 0x2000, scoped, tag = 'output window, operand 0']
    #allocation9 [shape = 'u8[1024]{0}', space=vmem, size = 0x400, scoped, tag = 'output window, operand 1']
    #allocation10 [shape = 's32[2]{0}', space=sflag, size = 0x8, scoped, tag = 'scoped memory for tpu_custom_call.1']
    #allocation11 [shape = 'u8[1024]{0}', space=vmem, size = 0x400, scoped, tag = 'output window, operand 2']
    %12 = vsyncpa [#allocation3], 0
    %s13 = scalar_lea.sflag [#allocation3], 1
    %14 = vsyncpa %s13, 0
    %15 = vsyncpa [#allocation6], 0
    %16 = vsyncpa [#allocation4], 0
    %s17 = scalar_lea.sflag [#allocation4], 1
    %18 = vsyncpa %s17, 0
    %19 = vsyncpa [#allocation10], 0
    %s20 = scalar_lea.sflag [#allocation10], 1
    %21 = vsyncpa %s20, 0
    loop: start=0, step=1, limit=4
    $region2: #{tpu_custom_call.1} parent=1 // loop_pre_header
      _
    $region3: #{tpu_custom_call.1} parent=1 // loop_header
      %s23 = sphi 0, %s27
      %p24 = scmp.ge.s32.totalorder %s23, 4
      %s30 = sphi 0, %s42
      %s31 = sphi 0, %s38
      %s32 = sphi 0, %s30
      %s33 = sphi 0, %s31
      %s34 = sphi 0, %s32
      %s35 = sphi 0, %s33
      %s47 = sphi 0, %s49
      %s50 = sphi 0, %s47
      %s51 = sphi 0, %s50
      %s67 = sphi 0, %s51
      %s73 = sphi 0, %s75
      %s76 = sphi 0, %s73
      %s77 = sphi 0, %s76
      %s93 = sphi 0, %s77
      %s97 = sphi 0, %s97
      %s99 = sphi 0, %s97
      %s100 = sphi 0, %s99
      %s114 = sphi 0, %s100
      %s118 = sphi 0, %s118
      %s120 = sphi 0, %s118
      %s121 = sphi 0, %s120
      %s135 = sphi 0, %s121
      %s143 = sphi 0, %s145
      %s146 = sphi 0, %s143
      %s147 = sphi 0, %s146
      %s163 = sphi 0, %s147
      %s171 = sphi 0, %s173
      %s174 = sphi 0, %s171
      %s175 = sphi 0, %s174
      %s191 = sphi 0, %s175
      %s199 = sphi 0, %s201
      %s202 = sphi 0, %s199
      %s203 = sphi 0, %s202
      %s219 = sphi 0, %s203
    $region4: #{tpu_custom_call.1} parent=1 // loop_header_branch
      %26 = sbr.rel (%p24) target = $region8
    $region5: #{tpu_custom_call.1} parent=1 // loop_body
      %s28 = ssub.s32 %s23, 1
      %s29 = ssub.s32 %s23, 2
      %s36 = sadd.s32 1, %s31
      %p37 = scmp.ge.s32.totalorder %s36, 1
      %s38 = scalar_select %p37, 0, %s36
      %s39 = sadd.s32 1, %s30
      %s40 = scalar_select %p37, %s39, %s30
      %p41 = scmp.ge.s32.totalorder %s40, 2
      %s42 = scalar_select %p41, 0, %s40
      %s43 = ssub.s32 %s30, %s42
      %s44 = ssub.s32 %s31, %s38
      %s45 = sor.u32 %s43, %s44
      %p46 = scmp.eq.s32.totalorder %s45, 0
      %s48 = sadd.s32 %s47, 1
      %s49 = scalar_select %p46, %s47, %s48
      %p52 = pneg %p46
      %p53 = scmp.eq.s32.totalorder %s23, 1
      %p54 = por %p52, %p53
      %p55 = scmp.ne.s32.totalorder %s47, %s50
      %p56 = scmp.eq.s32.totalorder %s23, 0
      %p57 = por %p55, %p56
      %p58 = scmp.ne.s32.totalorder %s47, %s50
      %p59 = scmp.eq.s32.totalorder %s28, 1
      %p60 = por %p58, %p59
      %p61 = scmp.ne.s32.totalorder %s50, %s51
      %p62 = scmp.eq.s32.totalorder %s28, 0
      %p63 = por %p61, %p62
      %p64 = scmp.ne.s32.totalorder %s50, %s51
      %p65 = scmp.eq.s32.totalorder %s29, 1
      %p66 = por %p64, %p65
      %p68 = scmp.ne.s32.totalorder %s51, %s67
      %p69 = scmp.eq.s32.totalorder %s29, 0
      %p70 = por %p68, %p69
      %s71 = ssub.s32 %s30, %s42
      %p72 = scmp.eq.s32.totalorder %s71, 0
      %s74 = sadd.s32 %s73, 1
      %s75 = scalar_select %p72, %s73, %s74
      %p78 = pneg %p72
      %p79 = scmp.eq.s32.totalorder %s23, 1
      %p80 = por %p78, %p79
      %p81 = scmp.ne.s32.totalorder %s73, %s76
      %p82 = scmp.eq.s32.totalorder %s23, 0
      %p83 = por %p81, %p82
      %p84 = scmp.ne.s32.totalorder %s73, %s76
      %p85 = scmp.eq.s32.totalorder %s28, 1
      %p86 = por %p84, %p85
      %p87 = scmp.ne.s32.totalorder %s76, %s77
      %p88 = scmp.eq.s32.totalorder %s28, 0
      %p89 = por %p87, %p88
      %p90 = scmp.ne.s32.totalorder %s76, %s77
      %p91 = scmp.eq.s32.totalorder %s29, 1
      %p92 = por %p90, %p91
      %p94 = scmp.ne.s32.totalorder %s77, %s93
      %p95 = scmp.eq.s32.totalorder %s29, 0
      %p96 = por %p94, %p95
      %s98 = sadd.s32 %s97, 1
      %p101 = scmp.eq.s32.totalorder %s23, 1
      %p102 = scmp.ne.s32.totalorder %s97, %s99
      %p103 = scmp.eq.s32.totalorder %s23, 0
      %p104 = por %p102, %p103
      %p105 = scmp.ne.s32.totalorder %s97, %s99
      %p106 = scmp.eq.s32.totalorder %s28, 1
      %p107 = por %p105, %p106
      %p108 = scmp.ne.s32.totalorder %s99, %s100
      %p109 = scmp.eq.s32.totalorder %s28, 0
      %p110 = por %p108, %p109
      %p111 = scmp.ne.s32.totalorder %s99, %s100
      %p112 = scmp.eq.s32.totalorder %s29, 1
      %p113 = por %p111, %p112
      %p115 = scmp.ne.s32.totalorder %s100, %s114
      %p116 = scmp.eq.s32.totalorder %s29, 0
      %p117 = por %p115, %p116
      %s119 = sadd.s32 %s118, 1
      %p122 = scmp.eq.s32.totalorder %s23, 1
      %p123 = scmp.ne.s32.totalorder %s118, %s120
      %p124 = scmp.eq.s32.totalorder %s23, 0
      %p125 = por %p123, %p124
      %p126 = scmp.ne.s32.totalorder %s118, %s120
      %p127 = scmp.eq.s32.totalorder %s28, 1
      %p128 = por %p126, %p127
      %p129 = scmp.ne.s32.totalorder %s120, %s121
      %p130 = scmp.eq.s32.totalorder %s28, 0
      %p131 = por %p129, %p130
      %p132 = scmp.ne.s32.totalorder %s120, %s121
      %p133 = scmp.eq.s32.totalorder %s29, 1
      %p134 = por %p132, %p133
      %p136 = scmp.ne.s32.totalorder %s121, %s135
      %p137 = scmp.eq.s32.totalorder %s29, 0
      %p138 = por %p136, %p137
      %s139 = ssub.s32 %s30, %s42
      %s140 = ssub.s32 %s31, %s38
      %s141 = sor.u32 %s139, %s140
      %p142 = scmp.eq.s32.totalorder %s141, 0
      %s144 = sadd.s32 %s143, 1
      %s145 = scalar_select %p142, %s143, %s144
      %p148 = pneg %p142
      %p149 = scmp.eq.s32.totalorder %s23, 1
      %p150 = por %p148, %p149
      %p151 = scmp.ne.s32.totalorder %s143, %s146
      %p152 = scmp.eq.s32.totalorder %s23, 0
      %p153 = por %p151, %p152
      %p154 = scmp.ne.s32.totalorder %s143, %s146
      %p155 = scmp.eq.s32.totalorder %s28, 1
      %p156 = por %p154, %p155
      %p157 = scmp.ne.s32.totalorder %s146, %s147
      %p158 = scmp.eq.s32.totalorder %s28, 0
      %p159 = por %p157, %p158
      %p160 = scmp.ne.s32.totalorder %s146, %s147
      %p161 = scmp.eq.s32.totalorder %s29, 1
      %p162 = por %p160, %p161
      %p164 = scmp.ne.s32.totalorder %s147, %s163
      %p165 = scmp.eq.s32.totalorder %s29, 0
      %p166 = por %p164, %p165
      %s167 = ssub.s32 %s30, %s42
      %s168 = ssub.s32 %s31, %s38
      %s169 = sor.u32 %s167, %s168
      %p170 = scmp.eq.s32.totalorder %s169, 0
      %s172 = sadd.s32 %s171, 1
      %s173 = scalar_select %p170, %s171, %s172
      %p176 = pneg %p170
      %p177 = scmp.eq.s32.totalorder %s23, 1
      %p178 = por %p176, %p177
      %p179 = scmp.ne.s32.totalorder %s171, %s174
      %p180 = scmp.eq.s32.totalorder %s23, 0
      %p181 = por %p179, %p180
      %p182 = scmp.ne.s32.totalorder %s171, %s174
      %p183 = scmp.eq.s32.totalorder %s28, 1
      %p184 = por %p182, %p183
      %p185 = scmp.ne.s32.totalorder %s174, %s175
      %p186 = scmp.eq.s32.totalorder %s28, 0
      %p187 = por %p185, %p186
      %p188 = scmp.ne.s32.totalorder %s174, %s175
      %p189 = scmp.eq.s32.totalorder %s29, 1
      %p190 = por %p188, %p189
      %p192 = scmp.ne.s32.totalorder %s175, %s191
      %p193 = scmp.eq.s32.totalorder %s29, 0
      %p194 = por %p192, %p193
      %s195 = ssub.s32 %s30, %s42
      %s196 = ssub.s32 %s31, %s38
      %s197 = sor.u32 %s195, %s196
      %p198 = scmp.eq.s32.totalorder %s197, 0
      %s200 = sadd.s32 %s199, 1
      %s201 = scalar_select %p198, %s199, %s200
      %p204 = pneg %p198
      %p205 = scmp.eq.s32.totalorder %s23, 1
      %p206 = por %p204, %p205
      %p207 = scmp.ne.s32.totalorder %s199, %s202
      %p208 = scmp.eq.s32.totalorder %s23, 0
      %p209 = por %p207, %p208
      %p210 = scmp.ne.s32.totalorder %s199, %s202
      %p211 = scmp.eq.s32.totalorder %s28, 1
      %p212 = por %p210, %p211
      %p213 = scmp.ne.s32.totalorder %s202, %s203
      %p214 = scmp.eq.s32.totalorder %s28, 0
      %p215 = por %p213, %p214
      %p216 = scmp.ne.s32.totalorder %s202, %s203
      %p217 = scmp.eq.s32.totalorder %s29, 1
      %p218 = por %p216, %p217
      %p220 = scmp.ne.s32.totalorder %s203, %s219
      %p221 = scmp.eq.s32.totalorder %s29, 0
      %p222 = por %p220, %p221
      %p223 = scmp.le.s32.totalorder 1, %s23
      %p224 = scmp.lt.s32.totalorder %s23, 3
      %p225 = pnand %p223, %p224
      %p226 = pneg %p225
      // Predicated region
      $region9: #{tpu_custom_call.1} parent=5 // pred_check
        _
      $region10: #{tpu_custom_call.1} parent=5 // pred_check_branch
        %228 = sbr.rel (%p225) target = $region12
      $region11: #{tpu_custom_call.1} parent=5 // pred_region
        %s229 = ssub.s32 %s23, 1
        // Predicated region
        $region13: #{tpu_custom_call.1} parent=11 // pred_check
          %p230 = pneg %p89
        $region14: #{tpu_custom_call.1} parent=11 // pred_check_branch
          %232 = sbr.rel (%p230) target = $region16
        $region15: #{tpu_custom_call.1} parent=11 // pred_region
          %234 = vsyncadd [#allocation6], 0
          %s235 = smul.addr %s32, 2
          %s236 = smul.addr %s235, 8
          %s237 = scalar_lea.hbm %s1, %s236
          %s238 = sshll.u32 %s237, 4
          %s239 = int_to_ptr.hbm [resolvable:$true] %s238
          %s240 = sshll.u32 [#allocation5], 4
          %s241 = int_to_ptr.vmem [resolvable:$true] %s240
          %246 = dma.hbm_to_vmem [thread:$0]  %s239, 256, %s241, [#allocation6], 128, 128, 8
        $region16: #{tpu_custom_call.1} parent=11 // pred_fallthru
          _
        // Predicated region
        $region17: #{tpu_custom_call.1} parent=11 // pred_check
          %p247 = pneg %p110
        $region18: #{tpu_custom_call.1} parent=11 // pred_check_branch
          %249 = sbr.rel (%p247) target = $region20
        $region19: #{tpu_custom_call.1} parent=11 // pred_region
          %251 = vsyncadd [#allocation6], 0
          %s252 = sshll.u32 %s2, 4
          %s253 = int_to_ptr.hbm [resolvable:$true] %s252
          %s254 = sshll.u32 [#allocation7], 4
          %s255 = int_to_ptr.vmem [resolvable:$true] %s254
          %260 = dma.hbm_to_vmem [thread:$0]  %s253, 128, %s255, [#allocation6], 64, 64, 4
        $region20: #{tpu_custom_call.1} parent=11 // pred_fallthru
          _
        // Predicated region
        $region21: #{tpu_custom_call.1} parent=11 // pred_check
          %p261 = pneg %p131
        $region22: #{tpu_custom_call.1} parent=11 // pred_check_branch
          %263 = sbr.rel (%p261) target = $region24
        $region23: #{tpu_custom_call.1} parent=11 // pred_region
          _
        $region24: #{tpu_custom_call.1} parent=11 // pred_fallthru
          _
      $region12: #{tpu_custom_call.1} parent=5 // pred_fallthru
        _
      %p264 = scmp.lt.s32.totalorder %s23, 2
      // Predicated region
      $region25: #{tpu_custom_call.1} parent=5 // pred_check
        %p265 = pneg %p264
      $region26: #{tpu_custom_call.1} parent=5 // pred_check_branch
        %267 = sbr.rel (%p265) target = $region28
      $region27: #{tpu_custom_call.1} parent=5 // pred_region
        // Predicated region
        $region29: #{tpu_custom_call.1} parent=27 // pred_check
          %p268 = pneg %p57
        $region30: #{tpu_custom_call.1} parent=27 // pred_check_branch
          %270 = sbr.rel (%p268) target = $region32
        $region31: #{tpu_custom_call.1} parent=27 // pred_region
          %s271 = sand.u32 %s47, 1
          %s272 = scalar_lea.sflag [#allocation3], %s271
          %s273 = sand.u32 %s47, 1
          %s274 = smul.addr %s273, 16
          %s275 = scalar_lea.vmem [#allocation2], %s274
          %s276 = smul.u32 2, %s31
          %278 = vsyncadd %s272, 0
          %s279 = smul.addr %s30, 2
          %s280 = sadd.s32 %s276, %s279
          %s281 = smul.addr %s280, 8
          %s282 = scalar_lea.hbm %s0, %s281
          %s283 = sshll.u32 %s282, 4
          %s284 = int_to_ptr.hbm [resolvable:$true] %s283
          %s285 = sshll.u32 %s275, 4
          %s286 = int_to_ptr.vmem [resolvable:$true] %s285
          %291 = dma.hbm_to_vmem [thread:$0]  %s284, 256, %s286, %s272, 128, 128, 8
        $region32: #{tpu_custom_call.1} parent=27 // pred_fallthru
          _
      $region28: #{tpu_custom_call.1} parent=5 // pred_fallthru
        _
      %p292 = scmp.le.s32.totalorder 1, %s23
      %p293 = scmp.lt.s32.totalorder %s23, 3
      %p294 = pnand %p292, %p293
      %p295 = pneg %p294
      // Predicated region
      $region33: #{tpu_custom_call.1} parent=5 // pred_check
        _
      $region34: #{tpu_custom_call.1} parent=5 // pred_check_branch
        %297 = sbr.rel (%p294) target = $region36
      $region35: #{tpu_custom_call.1} parent=5 // pred_region
        %s298 = ssub.s32 %s23, 1
        %s299 = sand.u32 %s50, 1
        %s300 = scalar_lea.sflag [#allocation3], %s299
        %s301 = sand.u32 %s50, 1
        %s302 = smul.addr %s301, 16
        %s303 = scalar_lea.vmem [#allocation2], %s302
        // Predicated region
        $region37: #{tpu_custom_call.1} parent=35 // pred_check
          %p304 = pneg %p63
        $region38: #{tpu_custom_call.1} parent=35 // pred_check_branch
          %306 = sbr.rel (%p304) target = $region40
        $region39: #{tpu_custom_call.1} parent=35 // pred_region
          %308 = dma.done %s300, 256
        $region40: #{tpu_custom_call.1} parent=35 // pred_fallthru
          _
        // Predicated region
        $region41: #{tpu_custom_call.1} parent=35 // pred_check
          %p309 = pneg %p89
        $region42: #{tpu_custom_call.1} parent=35 // pred_check_branch
          %311 = sbr.rel (%p309) target = $region44
        $region43: #{tpu_custom_call.1} parent=35 // pred_region
          %313 = dma.done [#allocation6], 256
        $region44: #{tpu_custom_call.1} parent=35 // pred_fallthru
          _
        // Predicated region
        $region45: #{tpu_custom_call.1} parent=35 // pred_check
          %p314 = pneg %p110
        $region46: #{tpu_custom_call.1} parent=35 // pred_check_branch
          %316 = sbr.rel (%p314) target = $region48
        $region47: #{tpu_custom_call.1} parent=35 // pred_region
          %318 = dma.done [#allocation6], 128
        $region48: #{tpu_custom_call.1} parent=35 // pred_fallthru
          _
        %s319 = sand.u32 %s50, 1
        %s320 = scalar_lea.sflag [#allocation3], %s319
        %s321 = sand.u32 %s50, 1
        %s322 = smul.addr %s321, 16
        %s323 = scalar_lea.vmem [#allocation2], %s322
        %p324 = pneg %p63
        %p325 = pneg %p60
        %p326 = pneg %p89
        %p327 = pneg %p86
        %p328 = pneg %p110
        %p329 = pneg %p107
        %p330 = pneg %p131
        %p331 = pneg %p128
        %p332 = pneg %p159
        %p333 = pneg %p156
        %s334 = sand.u32 %s146, 1
        %s335 = scalar_lea.sflag [#allocation4], %s334
        %s336 = sand.u32 %s146, 1
        %s337 = smul.addr %s336, 8
        %s338 = scalar_lea.vmem [#allocation8], %s337
        %p339 = pneg %p187
        %p340 = pneg %p184
        %s341 = sand.u32 %s28, 1
        %s342 = scalar_lea.sflag [#allocation10], %s341
        %s343 = sand.u32 %s174, 1
        %s344 = scalar_lea.vmem [#allocation9], %s343
        %p345 = pneg %p215
        %p346 = pneg %p212
        %s347 = sand.u32 %s28, 1
        %s348 = scalar_lea.sflag [#allocation10], %s347
        %s349 = sand.u32 %s202, 1
        %s350 = scalar_lea.vmem [#allocation11], %s349
        %s351 = smul.u32 2, %s33
        %s352 = smul.u32 2, %s33
        %v354 = vld [vmem:[%s303] sm:$0xff]
        %v355 = vld [vmem:[%s303 + $0x8] sm:$0xff]
        %v356 = vpack.c.bf16 %v355, %v354
        %v357 = vld [vmem:[#allocation5] sm:$0xff]
        %v358 = vld [vmem:[#allocation5 + $0x8] sm:$0xff]
        %v359 = vpack.c.bf16 %v358, %v357
        %vm360 = vcmask 130048
        %v362 = vsel %vm360, %v356, 0
        %364 = vmatpush.bf16.msra.mxu0 0
        %365 = vmatpush.bf16.msra.mxu0 0
        %366 = vmatpush.bf16.msra.mxu0 0
        %367 = vmatpush.bf16.msra.mxu0 0
        %368 = vmatpush.bf16.msra.mxu0 0
        %369 = vmatpush.bf16.msra.mxu0 0
        %370 = vmatpush.bf16.msra.mxu0 0
        %371 = vmatpush.bf16.msra.mxu0 %v359
        %372 = vmatmul.bf16.gmra.mxu0 %v362
        %v373 = vpop.f32.mrf.mxu0
        %v374 = vadd.f32 0.0, %v373
        %v375 = vpop.f32.mrf.mxu0
        %v376 = vadd.f32 0.0, %v375
        %377 = vdwg.mxu0
        %v378 = vpack.c.bf16 %v376, %v374
        %v379 = vld [vmem:[#allocation7] sm:$0xf]
        %v380 = vld [vmem:[#allocation7 + $0x4] sm:$0xf]
        %v381 = vld [vmem:[%s3] sm:$0x1]
        %v383 = vperm.slane %v381, 0
        %v387 = vunpack.c.l.b16 %v379
        %v388 = vunpack.c.l.b16 %v380
        %v389 = vpack.c.b16 %v388, %v387
        %v392 = vsel %vm360, %v378, 0
        %394 = vmatpush.bf16.msra.mxu0 0
        %395 = vmatpush.bf16.msra.mxu0 0
        %396 = vmatpush.bf16.msra.mxu0 0
        %397 = vmatpush.bf16.msra.mxu0 0
        %398 = vmatpush.bf16.msra.mxu0 0
        %399 = vmatpush.bf16.msra.mxu0 0
        %400 = vmatpush.bf16.msra.mxu0 0
        %401 = vmatpush.bf16.msra.mxu0 %v389
        %402 = vmatmul.bf16.gmra.mxu0 %v392
        %v403 = vpop.f32.mrf.mxu0
        %v404 = vadd.f32 %v383, %v403
        %v405 = vpop.f32.mrf.mxu0
        %v406 = vadd.f32 %v383, %v405
        %407 = vdwg.mxu0
        %v408 = vmul.f32 %v404, %v404
        %v409 = vmul.f32 %v406, %v406
        %410 = vadd.xlane.f32.xlu0 %v408
        %v411 = vpop.xlane.xlu0 %410
        %412 = vadd.xlane.f32.xlu0 %v409
        %v413 = vpop.xlane.xlu0 %412
        %v414 = vmax.f32 %v411, 1e-24
        %v415 = vmax.f32 %v413, 1e-24
        %v416 = vrsqrt.pop %v414
        %v417 = vmul.f32 %v416, %v414
        %v418 = vmul.f32 %v417, %v416
        %v419 = vmul.f32 0.5, %v418
        %v420 = vsub.f32 1.5, %v419
        %v421 = vmul.f32 %v416, %v420
        %vm422 = vweird.f32 %v414
        %vm423 = vweird.f32 %v416
        %vm424 = vmor %vm422, %vm423
        %v425 = vsel %vm424, %v416, %v421
        %v426 = vrsqrt.pop %v415
        %v427 = vmul.f32 %v426, %v415
        %v428 = vmul.f32 %v427, %v426
        %v429 = vmul.f32 0.5, %v428
        %v430 = vsub.f32 1.5, %v429
        %v431 = vmul.f32 %v426, %v430
        %vm432 = vweird.f32 %v415
        %vm433 = vweird.f32 %v426
        %vm434 = vmor %vm432, %vm433
        %v435 = vsel %vm434, %v426, %v431
        %v436 = vmul.f32 %v404, %v425
        %v437 = vmul.f32 %v406, %v435
        %v438 = vmax.f32 %v436, 0.0
        %v439 = vmax.f32 %v437, 0.0
        %v440 = vadd.f32 %v438, %v439
        %v441 = vrot.slane %v440, 4
        %v442 = vadd.f32 %v440, %v441
        %v443 = vrot.slane %v442, 2
        %v444 = vadd.f32 %v442, %v443
        %v445 = vrot.slane %v444, 1
        %v446 = vadd.f32 %v444, %v445
        %447 = vst [vmem:[%s344] sm:$0x1] %v446
        %v448 = vmul.f32 %v438, %v438
        %v449 = vmul.f32 %v439, %v439
        %v450 = vadd.f32 %v448, %v449
        %v451 = vrot.slane %v450, 4
        %v452 = vadd.f32 %v450, %v451
        %v453 = vrot.slane %v452, 2
        %v454 = vadd.f32 %v452, %v453
        %v455 = vrot.slane %v454, 1
        %v456 = vadd.f32 %v454, %v455
        %457 = vst [vmem:[%s350] sm:$0x1] %v456
        %v458 = vpack.c.bf16 %v438, %v438
        %v459 = vpack.c.bf16 %v439, %v439
        %460 = vst [vmem:[%s338] sm:$0xf] %v458
        %461 = vst [vmem:[%s338 + $0x4] sm:$0xf] %v459
        %s462 = sand.u32 %s146, 1
        %s463 = scalar_lea.sflag [#allocation4], %s462
        %s464 = sand.u32 %s146, 1
        %s465 = smul.addr %s464, 8
        %s466 = scalar_lea.vmem [#allocation8], %s465
        %s467 = sand.u32 %s28, 1
        %s468 = scalar_lea.sflag [#allocation10], %s467
        %s469 = sand.u32 %s174, 1
        %s470 = scalar_lea.vmem [#allocation9], %s469
        %s471 = sand.u32 %s28, 1
        %s472 = scalar_lea.sflag [#allocation10], %s471
        %s473 = sand.u32 %s202, 1
        %s474 = scalar_lea.vmem [#allocation11], %s473
        // Predicated region
        $region49: #{tpu_custom_call.1} parent=35 // pred_check
          %p475 = pneg %p156
        $region50: #{tpu_custom_call.1} parent=35 // pred_check_branch
          %477 = sbr.rel (%p475) target = $region52
        $region51: #{tpu_custom_call.1} parent=35 // pred_region
          %s478 = smul.u32 2, %s33
          %480 = vsyncadd %s463, 0
          %s481 = smul.addr %s32, 2
          %s482 = sadd.s32 %s478, %s481
          %s483 = smul.addr %s482, 4
          %s484 = scalar_lea.hbm %s4, %s483
          %s485 = sshll.u32 %s466, 4
          %s486 = int_to_ptr.vmem [resolvable:$true] %s485
          %s487 = sshll.u32 %s484, 4
          %s488 = int_to_ptr.hbm [resolvable:$true] %s487
          %493 = dma.vmem_to_hbm [thread:$0]  %s486, 128, %s488, %s463, 64, 64, 4
        $region52: #{tpu_custom_call.1} parent=35 // pred_fallthru
          _
        // Predicated region
        $region53: #{tpu_custom_call.1} parent=35 // pred_check
          %p494 = pneg %p184
        $region54: #{tpu_custom_call.1} parent=35 // pred_check_branch
          %496 = sbr.rel (%p494) target = $region56
        $region55: #{tpu_custom_call.1} parent=35 // pred_region
          %498 = vsyncadd %s468, 0
          %s499 = sadd.s32 %s33, %s32
          %s500 = scalar_lea.hbm %s5, %s499
          %s502 = sshll.u32 %s470, 4
          %s503 = int_to_ptr.vmem [resolvable:$true] %s502
          %s504 = sshll.u32 %s500, 4
          %s505 = int_to_ptr.hbm [resolvable:$true] %s504
          %507 = dma.vmem_to_hbm [thread:$0]  %s503, 16, %s505, %s468
        $region56: #{tpu_custom_call.1} parent=35 // pred_fallthru
          _
        // Predicated region
        $region57: #{tpu_custom_call.1} parent=35 // pred_check
          %p508 = pneg %p212
        $region58: #{tpu_custom_call.1} parent=35 // pred_check_branch
          %510 = sbr.rel (%p508) target = $region60
        $region59: #{tpu_custom_call.1} parent=35 // pred_region
          %512 = vsyncadd %s472, 0
          %s513 = sadd.s32 %s33, %s32
          %s514 = scalar_lea.hbm %s6, %s513
          %s516 = sshll.u32 %s474, 4
          %s517 = int_to_ptr.vmem [resolvable:$true] %s516
          %s518 = sshll.u32 %s514, 4
          %s519 = int_to_ptr.hbm [resolvable:$true] %s518
          %521 = dma.vmem_to_hbm [thread:$0]  %s517, 16, %s519, %s472
        $region60: #{tpu_custom_call.1} parent=35 // pred_fallthru
          _
      $region36: #{tpu_custom_call.1} parent=5 // pred_fallthru
        _
      %p522 = scmp.le.s32.totalorder 2, %s23
      // Predicated region
      $region61: #{tpu_custom_call.1} parent=5 // pred_check
        %p523 = pneg %p522
      $region62: #{tpu_custom_call.1} parent=5 // pred_check_branch
        %525 = sbr.rel (%p523) target = $region64
      $region63: #{tpu_custom_call.1} parent=5 // pred_region
        %s526 = ssub.s32 %s23, 2
        // Predicated region
        $region65: #{tpu_custom_call.1} parent=63 // pred_check
          %p527 = pneg %p162
        $region66: #{tpu_custom_call.1} parent=63 // pred_check_branch
          %529 = sbr.rel (%p527) target = $region68
        $region67: #{tpu_custom_call.1} parent=63 // pred_region
          %s530 = sand.u32 %s147, 1
          %s531 = scalar_lea.sflag [#allocation4], %s530
          %s532 = sand.u32 %s147, 1
          %s533 = smul.addr %s532, 8
          %s534 = scalar_lea.vmem [#allocation8], %s533
          %536 = dma.done %s531, 128
        $region68: #{tpu_custom_call.1} parent=63 // pred_fallthru
          _
        // Predicated region
        $region69: #{tpu_custom_call.1} parent=63 // pred_check
          %p537 = pneg %p190
        $region70: #{tpu_custom_call.1} parent=63 // pred_check_branch
          %539 = sbr.rel (%p537) target = $region72
        $region71: #{tpu_custom_call.1} parent=63 // pred_region
          %s540 = sand.u32 %s29, 1
          %s541 = scalar_lea.sflag [#allocation10], %s540
          %s542 = sand.u32 %s175, 1
          %s543 = scalar_lea.vmem [#allocation9], %s542
          %545 = dma.done %s541, 16
        $region72: #{tpu_custom_call.1} parent=63 // pred_fallthru
          _
        // Predicated region
        $region73: #{tpu_custom_call.1} parent=63 // pred_check
          %p546 = pneg %p218
        $region74: #{tpu_custom_call.1} parent=63 // pred_check_branch
          %548 = sbr.rel (%p546) target = $region76
        $region75: #{tpu_custom_call.1} parent=63 // pred_region
          %s549 = sand.u32 %s29, 1
          %s550 = scalar_lea.sflag [#allocation10], %s549
          %s551 = sand.u32 %s203, 1
          %s552 = scalar_lea.vmem [#allocation11], %s551
          %554 = dma.done %s550, 16
        $region76: #{tpu_custom_call.1} parent=63 // pred_fallthru
          _
      $region64: #{tpu_custom_call.1} parent=5 // pred_fallthru
        _
    $region6: #{tpu_custom_call.1} parent=1 // loop_footer
      %s27 = sadd.s32 1, %s23
    $region7: #{tpu_custom_call.1} parent=1 // loop_footer_branch
      %22 = sbr.rel target = $region3
    $region8: #{tpu_custom_call.1} parent=1 // loop_exit
      _
    %555 = vsyncpa [#allocation3], 1
    %s556 = scalar_lea.sflag [#allocation3], 1
    %557 = vsyncpa %s556, 1
    %558 = vsyncpa [#allocation6], 1
    %559 = vsyncpa [#allocation4], 1
    %s560 = scalar_lea.sflag [#allocation4], 1
    %561 = vsyncpa %s560, 1
    %562 = vsyncpa [#allocation10], 1
    %s563 = scalar_lea.sflag [#allocation10], 1
    %564 = vsyncpa %s563, 1

// kernel: tpu_custom_call.1
$region0: #{tpu_custom_call.1}
  #allocation0 [shape = 'u32[]', space=smem, size = 0x4, offset = 0x4, fixed_abs, tag = 'smem constant byte address 0x4 - core index']
  #allocation1 [shape = 'u32[72,128]{1,0:T(1,128)}', space=vmem, size = 0x9000, scoped, tag = 'internal scratch']
  %s0 = inlined_call_operand.hbm [shape: f32[2,16,16], index: 0, kind: input, shape index: {}]
  %s1 = inlined_call_operand.hbm [shape: f32[2,16,16], index: 1, kind: input, shape index: {}]
  %s2 = inlined_call_operand.hbm [shape: bf16[16,128], index: 2, kind: input, shape index: {}]
  %s3 = inlined_call_operand.vmem [shape: f32[1,128], index: 3, kind: input, shape index: {}]
  %s4 = inlined_call_operand.hbm [shape: bf16[2,16,128], index: 4, kind: output, shape index: {0}]
  %s5 = inlined_call_operand.hbm [shape: f32[2,1,1,128], index: 5, kind: output, shape index: {1}]
  %s6 = inlined_call_operand.hbm [shape: f32[2,1,1,128], index: 6, kind: output, shape index: {2}]
  %7 = xla_tuple %s4, %s5, %s6
  %s8 = sld [smem:[#allocation0]]
  $region77: #{tpu_custom_call.1} parent=0
    _
  %s10 = ssub.s32 1, %s8
  %s11 = scalar_select 0, %s10, %s8
  $region1: #{tpu_custom_call.1} parent=0
    #allocation2 [shape = 'u8[16384]{0}', space=vmem, size = 0x4000, scoped, tag = 'input window, operand 0']
    #allocation3 [shape = 's32[2]{0}', space=sflag, size = 0x8, scoped, tag = 'scoped memory for tpu_custom_call.1']
    #allocation4 [shape = 's32[2]{0}', space=sflag, size = 0x8, scoped, tag = 'scoped memory for tpu_custom_call.1']
    #allocation5 [shape = 'u8[16384]{0}', space=vmem, size = 0x4000, scoped, tag = 'input window, operand 1']
    #allocation6 [shape = 's32[2]{0}', space=sflag, size = 0x8, scoped, tag = 'scoped memory for tpu_custom_call.1']
    #allocation7 [shape = 'u8[4096]{0}', space=vmem, size = 0x1000, scoped, tag = 'input window, operand 2, single buffered']
    #allocation8 [shape = 'u8[8192]{0}', space=vmem, size = 0x2000, scoped, tag = 'output window, operand 0']
    #allocation9 [shape = 'u8[1024]{0}', space=vmem, size = 0x400, scoped, tag = 'output window, operand 1']
    #allocation10 [shape = 's32[2]{0}', space=sflag, size = 0x8, scoped, tag = 'scoped memory for tpu_custom_call.1']
    #allocation11 [shape = 'u8[1024]{0}', space=vmem, size = 0x400, scoped, tag = 'output window, operand 2']
    %12 = vsyncpa [#allocation3], 0
    %s13 = scalar_lea.sflag [#allocation3], 1
    %14 = vsyncpa %s13, 0
    %15 = vsyncpa [#allocation6], 0
    %s16 = scalar_lea.sflag [#allocation6], 1
    %17 = vsyncpa %s16, 0
    %18 = vsyncpa [#allocation4], 0
    %s19 = scalar_lea.sflag [#allocation4], 1
    %20 = vsyncpa %s19, 0
    %21 = vsyncpa [#allocation10], 0
    %s22 = scalar_lea.sflag [#allocation10], 1
    %23 = vsyncpa %s22, 0
    loop: start=0, step=1, limit=4
    $region2: #{tpu_custom_call.1} parent=1 // loop_pre_header
      _
    $region3: #{tpu_custom_call.1} parent=1 // loop_header
      %s25 = sphi 0, %s29
      %p26 = scmp.ge.s32.totalorder %s25, 4
      %s32 = sphi 0, %s44
      %s33 = sphi 0, %s40
      %s34 = sphi 0, %s32
      %s35 = sphi 0, %s33
      %s36 = sphi 0, %s34
      %s37 = sphi 0, %s35
      %s49 = sphi 0, %s51
      %s52 = sphi 0, %s49
      %s53 = sphi 0, %s52
      %s69 = sphi 0, %s53
      %s75 = sphi 0, %s77
      %s78 = sphi 0, %s75
      %s79 = sphi 0, %s78
      %s95 = sphi 0, %s79
      %s99 = sphi 0, %s99
      %s101 = sphi 0, %s99
      %s102 = sphi 0, %s101
      %s116 = sphi 0, %s102
      %s120 = sphi 0, %s120
      %s122 = sphi 0, %s120
      %s123 = sphi 0, %s122
      %s137 = sphi 0, %s123
      %s145 = sphi 0, %s147
      %s148 = sphi 0, %s145
      %s149 = sphi 0, %s148
      %s165 = sphi 0, %s149
      %s173 = sphi 0, %s175
      %s176 = sphi 0, %s173
      %s177 = sphi 0, %s176
      %s193 = sphi 0, %s177
      %s201 = sphi 0, %s203
      %s204 = sphi 0, %s201
      %s205 = sphi 0, %s204
      %s221 = sphi 0, %s205
    $region4: #{tpu_custom_call.1} parent=1 // loop_header_branch
      %28 = sbr.rel (%p26) target = $region8
    $region5: #{tpu_custom_call.1} parent=1 // loop_body
      %s30 = ssub.s32 %s25, 1
      %s31 = ssub.s32 %s25, 2
      %s38 = sadd.s32 1, %s33
      %p39 = scmp.ge.s32.totalorder %s38, 1
      %s40 = scalar_select %p39, 0, %s38
      %s41 = sadd.s32 1, %s32
      %s42 = scalar_select %p39, %s41, %s32
      %p43 = scmp.ge.s32.totalorder %s42, 2
      %s44 = scalar_select %p43, 0, %s42
      %s45 = ssub.s32 %s32, %s44
      %s46 = ssub.s32 %s33, %s40
      %s47 = sor.u32 %s45, %s46
      %p48 = scmp.eq.s32.totalorder %s47, 0
      %s50 = sadd.s32 %s49, 1
      %s51 = scalar_select %p48, %s49, %s50
      %p54 = pneg %p48
      %p55 = scmp.eq.s32.totalorder %s25, 1
      %p56 = por %p54, %p55
      %p57 = scmp.ne.s32.totalorder %s49, %s52
      %p58 = scmp.eq.s32.totalorder %s25, 0
      %p59 = por %p57, %p58
      %p60 = scmp.ne.s32.totalorder %s49, %s52
      %p61 = scmp.eq.s32.totalorder %s30, 1
      %p62 = por %p60, %p61
      %p63 = scmp.ne.s32.totalorder %s52, %s53
      %p64 = scmp.eq.s32.totalorder %s30, 0
      %p65 = por %p63, %p64
      %p66 = scmp.ne.s32.totalorder %s52, %s53
      %p67 = scmp.eq.s32.totalorder %s31, 1
      %p68 = por %p66, %p67
      %p70 = scmp.ne.s32.totalorder %s53, %s69
      %p71 = scmp.eq.s32.totalorder %s31, 0
      %p72 = por %p70, %p71
      %s73 = ssub.s32 %s32, %s44
      %p74 = scmp.eq.s32.totalorder %s73, 0
      %s76 = sadd.s32 %s75, 1
      %s77 = scalar_select %p74, %s75, %s76
      %p80 = pneg %p74
      %p81 = scmp.eq.s32.totalorder %s25, 1
      %p82 = por %p80, %p81
      %p83 = scmp.ne.s32.totalorder %s75, %s78
      %p84 = scmp.eq.s32.totalorder %s25, 0
      %p85 = por %p83, %p84
      %p86 = scmp.ne.s32.totalorder %s75, %s78
      %p87 = scmp.eq.s32.totalorder %s30, 1
      %p88 = por %p86, %p87
      %p89 = scmp.ne.s32.totalorder %s78, %s79
      %p90 = scmp.eq.s32.totalorder %s30, 0
      %p91 = por %p89, %p90
      %p92 = scmp.ne.s32.totalorder %s78, %s79
      %p93 = scmp.eq.s32.totalorder %s31, 1
      %p94 = por %p92, %p93
      %p96 = scmp.ne.s32.totalorder %s79, %s95
      %p97 = scmp.eq.s32.totalorder %s31, 0
      %p98 = por %p96, %p97
      %s100 = sadd.s32 %s99, 1
      %p103 = scmp.eq.s32.totalorder %s25, 1
      %p104 = scmp.ne.s32.totalorder %s99, %s101
      %p105 = scmp.eq.s32.totalorder %s25, 0
      %p106 = por %p104, %p105
      %p107 = scmp.ne.s32.totalorder %s99, %s101
      %p108 = scmp.eq.s32.totalorder %s30, 1
      %p109 = por %p107, %p108
      %p110 = scmp.ne.s32.totalorder %s101, %s102
      %p111 = scmp.eq.s32.totalorder %s30, 0
      %p112 = por %p110, %p111
      %p113 = scmp.ne.s32.totalorder %s101, %s102
      %p114 = scmp.eq.s32.totalorder %s31, 1
      %p115 = por %p113, %p114
      %p117 = scmp.ne.s32.totalorder %s102, %s116
      %p118 = scmp.eq.s32.totalorder %s31, 0
      %p119 = por %p117, %p118
      %s121 = sadd.s32 %s120, 1
      %p124 = scmp.eq.s32.totalorder %s25, 1
      %p125 = scmp.ne.s32.totalorder %s120, %s122
      %p126 = scmp.eq.s32.totalorder %s25, 0
      %p127 = por %p125, %p126
      %p128 = scmp.ne.s32.totalorder %s120, %s122
      %p129 = scmp.eq.s32.totalorder %s30, 1
      %p130 = por %p128, %p129
      %p131 = scmp.ne.s32.totalorder %s122, %s123
      %p132 = scmp.eq.s32.totalorder %s30, 0
      %p133 = por %p131, %p132
      %p134 = scmp.ne.s32.totalorder %s122, %s123
      %p135 = scmp.eq.s32.totalorder %s31, 1
      %p136 = por %p134, %p135
      %p138 = scmp.ne.s32.totalorder %s123, %s137
      %p139 = scmp.eq.s32.totalorder %s31, 0
      %p140 = por %p138, %p139
      %s141 = ssub.s32 %s32, %s44
      %s142 = ssub.s32 %s33, %s40
      %s143 = sor.u32 %s141, %s142
      %p144 = scmp.eq.s32.totalorder %s143, 0
      %s146 = sadd.s32 %s145, 1
      %s147 = scalar_select %p144, %s145, %s146
      %p150 = pneg %p144
      %p151 = scmp.eq.s32.totalorder %s25, 1
      %p152 = por %p150, %p151
      %p153 = scmp.ne.s32.totalorder %s145, %s148
      %p154 = scmp.eq.s32.totalorder %s25, 0
      %p155 = por %p153, %p154
      %p156 = scmp.ne.s32.totalorder %s145, %s148
      %p157 = scmp.eq.s32.totalorder %s30, 1
      %p158 = por %p156, %p157
      %p159 = scmp.ne.s32.totalorder %s148, %s149
      %p160 = scmp.eq.s32.totalorder %s30, 0
      %p161 = por %p159, %p160
      %p162 = scmp.ne.s32.totalorder %s148, %s149
      %p163 = scmp.eq.s32.totalorder %s31, 1
      %p164 = por %p162, %p163
      %p166 = scmp.ne.s32.totalorder %s149, %s165
      %p167 = scmp.eq.s32.totalorder %s31, 0
      %p168 = por %p166, %p167
      %s169 = ssub.s32 %s32, %s44
      %s170 = ssub.s32 %s33, %s40
      %s171 = sor.u32 %s169, %s170
      %p172 = scmp.eq.s32.totalorder %s171, 0
      %s174 = sadd.s32 %s173, 1
      %s175 = scalar_select %p172, %s173, %s174
      %p178 = pneg %p172
      %p179 = scmp.eq.s32.totalorder %s25, 1
      %p180 = por %p178, %p179
      %p181 = scmp.ne.s32.totalorder %s173, %s176
      %p182 = scmp.eq.s32.totalorder %s25, 0
      %p183 = por %p181, %p182
      %p184 = scmp.ne.s32.totalorder %s173, %s176
      %p185 = scmp.eq.s32.totalorder %s30, 1
      %p186 = por %p184, %p185
      %p187 = scmp.ne.s32.totalorder %s176, %s177
      %p188 = scmp.eq.s32.totalorder %s30, 0
      %p189 = por %p187, %p188
      %p190 = scmp.ne.s32.totalorder %s176, %s177
      %p191 = scmp.eq.s32.totalorder %s31, 1
      %p192 = por %p190, %p191
      %p194 = scmp.ne.s32.totalorder %s177, %s193
      %p195 = scmp.eq.s32.totalorder %s31, 0
      %p196 = por %p194, %p195
      %s197 = ssub.s32 %s32, %s44
      %s198 = ssub.s32 %s33, %s40
      %s199 = sor.u32 %s197, %s198
      %p200 = scmp.eq.s32.totalorder %s199, 0
      %s202 = sadd.s32 %s201, 1
      %s203 = scalar_select %p200, %s201, %s202
      %p206 = pneg %p200
      %p207 = scmp.eq.s32.totalorder %s25, 1
      %p208 = por %p206, %p207
      %p209 = scmp.ne.s32.totalorder %s201, %s204
      %p210 = scmp.eq.s32.totalorder %s25, 0
      %p211 = por %p209, %p210
      %p212 = scmp.ne.s32.totalorder %s201, %s204
      %p213 = scmp.eq.s32.totalorder %s30, 1
      %p214 = por %p212, %p213
      %p215 = scmp.ne.s32.totalorder %s204, %s205
      %p216 = scmp.eq.s32.totalorder %s30, 0
      %p217 = por %p215, %p216
      %p218 = scmp.ne.s32.totalorder %s204, %s205
      %p219 = scmp.eq.s32.totalorder %s31, 1
      %p220 = por %p218, %p219
      %p222 = scmp.ne.s32.totalorder %s205, %s221
      %p223 = scmp.eq.s32.totalorder %s31, 0
      %p224 = por %p222, %p223
      %p225 = scmp.le.s32.totalorder 1, %s25
      %p226 = scmp.lt.s32.totalorder %s25, 3
      %p227 = pnand %p225, %p226
      %p228 = pneg %p227
      // Predicated region
      $region9: #{tpu_custom_call.1} parent=5 // pred_check
        _
      $region10: #{tpu_custom_call.1} parent=5 // pred_check_branch
        %230 = sbr.rel (%p227) target = $region12
      $region11: #{tpu_custom_call.1} parent=5 // pred_region
        %s231 = ssub.s32 %s25, 1
        // Predicated region
        $region13: #{tpu_custom_call.1} parent=11 // pred_check
          %p232 = pneg %p112
        $region14: #{tpu_custom_call.1} parent=11 // pred_check_branch
          %234 = sbr.rel (%p232) target = $region16
        $region15: #{tpu_custom_call.1} parent=11 // pred_region
          %236 = vsyncadd [#allocation6], 0
          %s237 = sshll.u32 %s2, 4
          %s238 = int_to_ptr.hbm [resolvable:$true] %s237
          %s239 = sshll.u32 [#allocation7], 4
          %s240 = int_to_ptr.vmem [resolvable:$true] %s239
          %245 = dma.hbm_to_vmem [thread:$0]  %s238, 128, %s240, [#allocation6], 64, 64, 4
        $region16: #{tpu_custom_call.1} parent=11 // pred_fallthru
          _
        // Predicated region
        $region17: #{tpu_custom_call.1} parent=11 // pred_check
          %p246 = pneg %p133
        $region18: #{tpu_custom_call.1} parent=11 // pred_check_branch
          %248 = sbr.rel (%p246) target = $region20
        $region19: #{tpu_custom_call.1} parent=11 // pred_region
          _
        $region20: #{tpu_custom_call.1} parent=11 // pred_fallthru
          _
      $region12: #{tpu_custom_call.1} parent=5 // pred_fallthru
        _
      %p249 = scmp.lt.s32.totalorder %s25, 2
      // Predicated region
      $region21: #{tpu_custom_call.1} parent=5 // pred_check
        %p250 = pneg %p249
      $region22: #{tpu_custom_call.1} parent=5 // pred_check_branch
        %252 = sbr.rel (%p250) target = $region24
      $region23: #{tpu_custom_call.1} parent=5 // pred_region
        // Predicated region
        $region25: #{tpu_custom_call.1} parent=23 // pred_check
          %p253 = pneg %p59
        $region26: #{tpu_custom_call.1} parent=23 // pred_check_branch
          %255 = sbr.rel (%p253) target = $region28
        $region27: #{tpu_custom_call.1} parent=23 // pred_region
          %s256 = sand.u32 %s49, 1
          %s257 = scalar_lea.sflag [#allocation3], %s256
          %s258 = sand.u32 %s49, 1
          %s259 = smul.addr %s258, 16
          %s260 = scalar_lea.vmem [#allocation2], %s259
          %s261 = smul.u32 2, %s33
          %263 = vsyncadd %s257, 0
          %s264 = smul.addr %s32, 2
          %s265 = sadd.s32 %s261, %s264
          %s266 = smul.addr %s265, 8
          %s267 = scalar_lea.hbm %s0, %s266
          %s268 = sshll.u32 %s267, 4
          %s269 = int_to_ptr.hbm [resolvable:$true] %s268
          %s270 = sshll.u32 %s260, 4
          %s271 = int_to_ptr.vmem [resolvable:$true] %s270
          %276 = dma.hbm_to_vmem [thread:$0]  %s269, 256, %s271, %s257, 128, 128, 8
        $region28: #{tpu_custom_call.1} parent=23 // pred_fallthru
          _
        // Predicated region
        $region29: #{tpu_custom_call.1} parent=23 // pred_check
          %p277 = pneg %p85
        $region30: #{tpu_custom_call.1} parent=23 // pred_check_branch
          %279 = sbr.rel (%p277) target = $region32
        $region31: #{tpu_custom_call.1} parent=23 // pred_region
          %s280 = sand.u32 %s25, 1
          %s281 = scalar_lea.sflag [#allocation6], %s280
          %s282 = sand.u32 %s75, 1
          %s283 = smul.addr %s282, 16
          %s284 = scalar_lea.vmem [#allocation5], %s283
          %286 = vsyncadd %s281, 0
          %s287 = smul.addr %s32, 2
          %s288 = smul.addr %s287, 8
          %s289 = scalar_lea.hbm %s1, %s288
          %s290 = sshll.u32 %s289, 4
          %s291 = int_to_ptr.hbm [resolvable:$true] %s290
          %s292 = sshll.u32 %s284, 4
          %s293 = int_to_ptr.vmem [resolvable:$true] %s292
          %298 = dma.hbm_to_vmem [thread:$0]  %s291, 256, %s293, %s281, 128, 128, 8
        $region32: #{tpu_custom_call.1} parent=23 // pred_fallthru
          _
      $region24: #{tpu_custom_call.1} parent=5 // pred_fallthru
        _
      %p299 = scmp.le.s32.totalorder 1, %s25
      %p300 = scmp.lt.s32.totalorder %s25, 3
      %p301 = pnand %p299, %p300
      %p302 = pneg %p301
      // Predicated region
      $region33: #{tpu_custom_call.1} parent=5 // pred_check
        _
      $region34: #{tpu_custom_call.1} parent=5 // pred_check_branch
        %304 = sbr.rel (%p301) target = $region36
      $region35: #{tpu_custom_call.1} parent=5 // pred_region
        %s305 = ssub.s32 %s25, 1
        %s306 = sand.u32 %s52, 1
        %s307 = scalar_lea.sflag [#allocation3], %s306
        %s308 = sand.u32 %s52, 1
        %s309 = smul.addr %s308, 16
        %s310 = scalar_lea.vmem [#allocation2], %s309
        // Predicated region
        $region37: #{tpu_custom_call.1} parent=35 // pred_check
          %p311 = pneg %p65
        $region38: #{tpu_custom_call.1} parent=35 // pred_check_branch
          %313 = sbr.rel (%p311) target = $region40
        $region39: #{tpu_custom_call.1} parent=35 // pred_region
          %315 = dma.done %s307, 256
        $region40: #{tpu_custom_call.1} parent=35 // pred_fallthru
          _
        %s316 = sand.u32 %s30, 1
        %s317 = scalar_lea.sflag [#allocation6], %s316
        %s318 = sand.u32 %s78, 1
        %s319 = smul.addr %s318, 16
        %s320 = scalar_lea.vmem [#allocation5], %s319
        // Predicated region
        $region41: #{tpu_custom_call.1} parent=35 // pred_check
          %p321 = pneg %p91
        $region42: #{tpu_custom_call.1} parent=35 // pred_check_branch
          %323 = sbr.rel (%p321) target = $region44
        $region43: #{tpu_custom_call.1} parent=35 // pred_region
          %325 = dma.done %s317, 256
        $region44: #{tpu_custom_call.1} parent=35 // pred_fallthru
          _
        // Predicated region
        $region45: #{tpu_custom_call.1} parent=35 // pred_check
          %p326 = pneg %p112
        $region46: #{tpu_custom_call.1} parent=35 // pred_check_branch
          %328 = sbr.rel (%p326) target = $region48
        $region47: #{tpu_custom_call.1} parent=35 // pred_region
          %330 = dma.done [#allocation6], 128
        $region48: #{tpu_custom_call.1} parent=35 // pred_fallthru
          _
        %s331 = sand.u32 %s52, 1
        %s332 = scalar_lea.sflag [#allocation3], %s331
        %s333 = sand.u32 %s52, 1
        %s334 = smul.addr %s333, 16
        %s335 = scalar_lea.vmem [#allocation2], %s334
        %p336 = pneg %p65
        %p337 = pneg %p62
        %s338 = sand.u32 %s30, 1
        %s339 = scalar_lea.sflag [#allocation6], %s338
        %s340 = sand.u32 %s78, 1
        %s341 = smul.addr %s340, 16
        %s342 = scalar_lea.vmem [#allocation5], %s341
        %p343 = pneg %p91
        %p344 = pneg %p88
        %p345 = pneg %p112
        %p346 = pneg %p109
        %p347 = pneg %p133
        %p348 = pneg %p130
        %p349 = pneg %p161
        %p350 = pneg %p158
        %s351 = sand.u32 %s148, 1
        %s352 = scalar_lea.sflag [#allocation4], %s351
        %s353 = sand.u32 %s148, 1
        %s354 = smul.addr %s353, 8
        %s355 = scalar_lea.vmem [#allocation8], %s354
        %p356 = pneg %p189
        %p357 = pneg %p186
        %s358 = sand.u32 %s30, 1
        %s359 = scalar_lea.sflag [#allocation10], %s358
        %s360 = sand.u32 %s176, 1
        %s361 = scalar_lea.vmem [#allocation9], %s360
        %p362 = pneg %p217
        %p363 = pneg %p214
        %s364 = sand.u32 %s30, 1
        %s365 = scalar_lea.sflag [#allocation10], %s364
        %s366 = sand.u32 %s204, 1
        %s367 = scalar_lea.vmem [#allocation11], %s366
        %s368 = smul.u32 2, %s35
        %s369 = smul.u32 2, %s35
        %v371 = vld [vmem:[%s310] sm:$0xff]
        %v372 = vld [vmem:[%s310 + $0x8] sm:$0xff]
        %v373 = vpack.c.bf16 %v372, %v371
        %v374 = vld [vmem:[%s320] sm:$0xff]
        %v375 = vld [vmem:[%s320 + $0x8] sm:$0xff]
        %v376 = vpack.c.bf16 %v375, %v374
        %vm377 = vcmask 130048
        %v379 = vsel %vm377, %v373, 0
        %381 = vmatpush.bf16.msra.mxu0 0
        %382 = vmatpush.bf16.msra.mxu0 0
        %383 = vmatpush.bf16.msra.mxu0 0
        %384 = vmatpush.bf16.msra.mxu0 0
        %385 = vmatpush.bf16.msra.mxu0 0
        %386 = vmatpush.bf16.msra.mxu0 0
        %387 = vmatpush.bf16.msra.mxu0 0
        %388 = vmatpush.bf16.msra.mxu0 %v376
        %389 = vmatmul.bf16.gmra.mxu0 %v379
        %v390 = vpop.f32.mrf.mxu0
        %v391 = vadd.f32 0.0, %v390
        %v392 = vpop.f32.mrf.mxu0
        %v393 = vadd.f32 0.0, %v392
        %394 = vdwg.mxu0
        %v395 = vpack.c.bf16 %v393, %v391
        %v396 = vld [vmem:[#allocation7] sm:$0xf]
        %v397 = vld [vmem:[#allocation7 + $0x4] sm:$0xf]
        %v398 = vld [vmem:[%s3] sm:$0x1]
        %v400 = vperm.slane %v398, 0
        %v404 = vunpack.c.l.b16 %v396
        %v405 = vunpack.c.l.b16 %v397
        %v406 = vpack.c.b16 %v405, %v404
        %v409 = vsel %vm377, %v395, 0
        %411 = vmatpush.bf16.msra.mxu0 0
        %412 = vmatpush.bf16.msra.mxu0 0
        %413 = vmatpush.bf16.msra.mxu0 0
        %414 = vmatpush.bf16.msra.mxu0 0
        %415 = vmatpush.bf16.msra.mxu0 0
        %416 = vmatpush.bf16.msra.mxu0 0
        %417 = vmatpush.bf16.msra.mxu0 0
        %418 = vmatpush.bf16.msra.mxu0 %v406
        %419 = vmatmul.bf16.gmra.mxu0 %v409
        %v420 = vpop.f32.mrf.mxu0
        %v421 = vadd.f32 %v400, %v420
        %v422 = vpop.f32.mrf.mxu0
        %v423 = vadd.f32 %v400, %v422
        %424 = vdwg.mxu0
        %v425 = vmul.f32 %v421, %v421
        %v426 = vmul.f32 %v423, %v423
        %427 = vadd.xlane.f32.xlu0 %v425
        %v428 = vpop.xlane.xlu0 %427
        %429 = vadd.xlane.f32.xlu0 %v426
        %v430 = vpop.xlane.xlu0 %429
        %v431 = vmax.f32 %v428, 1e-24
        %v432 = vmax.f32 %v430, 1e-24
        %v433 = vrsqrt.pop %v431
        %v434 = vmul.f32 %v433, %v431
        %v435 = vmul.f32 %v434, %v433
        %v436 = vmul.f32 0.5, %v435
        %v437 = vsub.f32 1.5, %v436
        %v438 = vmul.f32 %v433, %v437
        %vm439 = vweird.f32 %v431
        %vm440 = vweird.f32 %v433
        %vm441 = vmor %vm439, %vm440
        %v442 = vsel %vm441, %v433, %v438
        %v443 = vrsqrt.pop %v432
        %v444 = vmul.f32 %v443, %v432
        %v445 = vmul.f32 %v444, %v443
        %v446 = vmul.f32 0.5, %v445
        %v447 = vsub.f32 1.5, %v446
        %v448 = vmul.f32 %v443, %v447
        %vm449 = vweird.f32 %v432
        %vm450 = vweird.f32 %v443
        %vm451 = vmor %vm449, %vm450
        %v452 = vsel %vm451, %v443, %v448
        %v453 = vmul.f32 %v421, %v442
        %v454 = vmul.f32 %v423, %v452
        %v455 = vmax.f32 %v453, 0.0
        %v456 = vmax.f32 %v454, 0.0
        %v457 = vadd.f32 %v455, %v456
        %v458 = vrot.slane %v457, 4
        %v459 = vadd.f32 %v457, %v458
        %v460 = vrot.slane %v459, 2
        %v461 = vadd.f32 %v459, %v460
        %v462 = vrot.slane %v461, 1
        %v463 = vadd.f32 %v461, %v462
        %464 = vst [vmem:[%s361] sm:$0x1] %v463
        %v465 = vmul.f32 %v455, %v455
        %v466 = vmul.f32 %v456, %v456
        %v467 = vadd.f32 %v465, %v466
        %v468 = vrot.slane %v467, 4
        %v469 = vadd.f32 %v467, %v468
        %v470 = vrot.slane %v469, 2
        %v471 = vadd.f32 %v469, %v470
        %v472 = vrot.slane %v471, 1
        %v473 = vadd.f32 %v471, %v472
        %474 = vst [vmem:[%s367] sm:$0x1] %v473
        %v475 = vpack.c.bf16 %v455, %v455
        %v476 = vpack.c.bf16 %v456, %v456
        %477 = vst [vmem:[%s355] sm:$0xf] %v475
        %478 = vst [vmem:[%s355 + $0x4] sm:$0xf] %v476
        %s479 = sand.u32 %s148, 1
        %s480 = scalar_lea.sflag [#allocation4], %s479
        %s481 = sand.u32 %s148, 1
        %s482 = smul.addr %s481, 8
        %s483 = scalar_lea.vmem [#allocation8], %s482
        %s484 = sand.u32 %s30, 1
        %s485 = scalar_lea.sflag [#allocation10], %s484
        %s486 = sand.u32 %s176, 1
        %s487 = scalar_lea.vmem [#allocation9], %s486
        %s488 = sand.u32 %s30, 1
        %s489 = scalar_lea.sflag [#allocation10], %s488
        %s490 = sand.u32 %s204, 1
        %s491 = scalar_lea.vmem [#allocation11], %s490
        // Predicated region
        $region49: #{tpu_custom_call.1} parent=35 // pred_check
          %p492 = pneg %p158
        $region50: #{tpu_custom_call.1} parent=35 // pred_check_branch
          %494 = sbr.rel (%p492) target = $region52
        $region51: #{tpu_custom_call.1} parent=35 // pred_region
          %s495 = smul.u32 2, %s35
          %497 = vsyncadd %s480, 0
          %s498 = smul.addr %s34, 2
          %s499 = sadd.s32 %s495, %s498
          %s500 = smul.addr %s499, 4
          %s501 = scalar_lea.hbm %s4, %s500
          %s502 = sshll.u32 %s483, 4
          %s503 = int_to_ptr.vmem [resolvable:$true] %s502
          %s504 = sshll.u32 %s501, 4
          %s505 = int_to_ptr.hbm [resolvable:$true] %s504
          %510 = dma.vmem_to_hbm [thread:$0]  %s503, 128, %s505, %s480, 64, 64, 4
        $region52: #{tpu_custom_call.1} parent=35 // pred_fallthru
          _
        // Predicated region
        $region53: #{tpu_custom_call.1} parent=35 // pred_check
          %p511 = pneg %p186
        $region54: #{tpu_custom_call.1} parent=35 // pred_check_branch
          %513 = sbr.rel (%p511) target = $region56
        $region55: #{tpu_custom_call.1} parent=35 // pred_region
          %515 = vsyncadd %s485, 0
          %s516 = sadd.s32 %s35, %s34
          %s517 = scalar_lea.hbm %s5, %s516
          %s519 = sshll.u32 %s487, 4
          %s520 = int_to_ptr.vmem [resolvable:$true] %s519
          %s521 = sshll.u32 %s517, 4
          %s522 = int_to_ptr.hbm [resolvable:$true] %s521
          %524 = dma.vmem_to_hbm [thread:$0]  %s520, 16, %s522, %s485
        $region56: #{tpu_custom_call.1} parent=35 // pred_fallthru
          _
        // Predicated region
        $region57: #{tpu_custom_call.1} parent=35 // pred_check
          %p525 = pneg %p214
        $region58: #{tpu_custom_call.1} parent=35 // pred_check_branch
          %527 = sbr.rel (%p525) target = $region60
        $region59: #{tpu_custom_call.1} parent=35 // pred_region
          %529 = vsyncadd %s489, 0
          %s530 = sadd.s32 %s35, %s34
          %s531 = scalar_lea.hbm %s6, %s530
          %s533 = sshll.u32 %s491, 4
          %s534 = int_to_ptr.vmem [resolvable:$true] %s533
          %s535 = sshll.u32 %s531, 4
          %s536 = int_to_ptr.hbm [resolvable:$true] %s535
          %538 = dma.vmem_to_hbm [thread:$0]  %s534, 16, %s536, %s489
        $region60: #{tpu_custom_call.1} parent=35 // pred_fallthru
          _
      $region36: #{tpu_custom_call.1} parent=5 // pred_fallthru
        _
      %p539 = scmp.le.s32.totalorder 2, %s25
      // Predicated region
      $region61: #{tpu_custom_call.1} parent=5 // pred_check
        %p540 = pneg %p539
      $region62: #{tpu_custom_call.1} parent=5 // pred_check_branch
        %542 = sbr.rel (%p540) target = $region64
      $region63: #{tpu_custom_call.1} parent=5 // pred_region
        %s543 = ssub.s32 %s25, 2
        // Predicated region
        $region65: #{tpu_custom_call.1} parent=63 // pred_check
          %p544 = pneg %p164
        $region66: #{tpu_custom_call.1} parent=63 // pred_check_branch
          %546 = sbr.rel (%p544) target = $region68
        $region67: #{tpu_custom_call.1} parent=63 // pred_region
          %s547 = sand.u32 %s149, 1
          %s548 = scalar_lea.sflag [#allocation4], %s547
          %s549 = sand.u32 %s149, 1
          %s550 = smul.addr %s549, 8
          %s551 = scalar_lea.vmem [#allocation8], %s550
          %553 = dma.done %s548, 128
        $region68: #{tpu_custom_call.1} parent=63 // pred_fallthru
          _
        // Predicated region
        $region69: #{tpu_custom_call.1} parent=63 // pred_check
          %p554 = pneg %p192
        $region70: #{tpu_custom_call.1} parent=63 // pred_check_branch
          %556 = sbr.rel (%p554) target = $region72
        $region71: #{tpu_custom_call.1} parent=63 // pred_region
          %s557 = sand.u32 %s31, 1
          %s558 = scalar_lea.sflag [#allocation10], %s557
          %s559 = sand.u32 %s177, 1
          %s560 = scalar_lea.vmem [#allocation9], %s559
          %562 = dma.done %s558, 16
        $region72: #{tpu_custom_call.1} parent=63 // pred_fallthru
          _
        // Predicated region
        $region73: #{tpu_custom_call.1} parent=63 // pred_check
          %p563 = pneg %p220
        $region74: #{tpu_custom_call.1} parent=63 // pred_check_branch
          %565 = sbr.rel (%p563) target = $region76
        $region75: #{tpu_custom_call.1} parent=63 // pred_region
          %s566 = sand.u32 %s31, 1
          %s567 = scalar_lea.sflag [#allocation10], %s566
          %s568 = sand.u32 %s205, 1
          %s569 = scalar_lea.vmem [#allocation11], %s568
          %571 = dma.done %s567, 16
        $region76: #{tpu_custom_call.1} parent=63 // pred_fallthru
          _
      $region64: #{tpu_custom_call.1} parent=5 // pred_fallthru
        _
    $region6: #{tpu_custom_call.1} parent=1 // loop_footer
      %s29 = sadd.s32 1, %s25
    $region7: #{tpu_custom_call.1} parent=1 // loop_footer_branch
      %24 = sbr.rel target = $region3
    $region8: #{tpu_custom_call.1} parent=1 // loop_exit
      _
    %572 = vsyncpa [#allocation3], 1
    %s573 = scalar_lea.sflag [#allocation3], 1
    %574 = vsyncpa %s573, 1
    %575 = vsyncpa [#allocation6], 1
    %s576 = scalar_lea.sflag [#allocation6], 1
    %577 = vsyncpa %s576, 1
    %578 = vsyncpa [#allocation4], 1
    %s579 = scalar_lea.sflag [#allocation4], 1
    %580 = vsyncpa %s579, 1
    %581 = vsyncpa [#allocation10], 1
    %s582 = scalar_lea.sflag [#allocation10], 1
    %583 = vsyncpa %s582, 1

</llo_original>
